<compile_context>
chip_gen: v6e
topology: v6e:2x2x1
jax: 0.10.0
libtpu: 0.0.40
codegen_flags: <defaults>
</compile_context>

<pallas_src>
import jax
import jax.numpy as jnp
from jax import lax
from jax.experimental import pallas as pl
from jax.experimental.pallas import tpu as pltpu


def _round_up(n, m):
    return (n + m - 1) // m * m


# ----------------------------- Pallas kernel -------------------------------
def qrnn_kernel(x_ref, wx_ref, bxu_ref, wu_ref, wo_ref, bo_ref,
                out_ref, h_ref, hs_ref):
    """One (batch-tile, seq-chunk) grid point of the QRNN recurrence.

    x_ref  : (TC, TB, F)    bf16  streamed input chunk
    wx_ref : (F,  Hp)       bf16  resident
    bxu_ref: (1,  Hp)       f32   bx + bu folded into one bias
    wu_ref : (Hp, Hp)       bf16  resident
    wo_ref : (Hp, Np)       bf16  resident
    bo_ref : (1,  Np)       f32
    out_ref: (TC, TB, Np)
    h_ref  : (TB, Hp)  f32  scratch - recurrent state carried across chunks
    hs_ref : (TC, TB, Hp) f32 scratch - chunk-local wx_out, overwritten with h_t
    """
    f32, bf16 = jnp.float32, jnp.bfloat16
    c = pl.program_id(1)
    TC, TB, F = x_ref.shape
    Hp = h_ref.shape[-1]
    Np = out_ref.shape[-1]

    # New batch tile -> reset the recurrent hidden state.
    @pl.when(c == 0)
    def _():
        h_ref[...] = jnp.zeros_like(h_ref)

    # (1) Hoisted: wx_out = x_chunk @ Wx + (bx + bu), one big-M matmul per chunk.
    x_chunk = x_ref[...].reshape(TC * TB, F)
    wx_out = jnp.dot(x_chunk, wx_ref[...], preferred_element_type=f32) + bxu_ref[...]
    hs_ref[...] = wx_out.reshape(TC, TB, Hp)

    # (2) Serial recurrence: only h @ Wu remains on the per-step critical path.
    #     h is carried in f32 (bf16 is only ever the matmul operand copy).
    wu = wu_ref[...]

    def step(t, h_prev):
        h_new = hs_ref[t] + jnp.dot(h_prev.astype(bf16), wu,
                                    preferred_element_type=f32)
        hs_ref[t] = h_new                 # overwrite wx_out with the hidden state
        return h_new

    h_ref[...] = lax.fori_loop(0, TC, step, h_ref[...], unroll=True)

    # (3) Deferred: out = tanh(h @ Wo + bo), one big-M matmul per chunk.
    hs = hs_ref[...].reshape(TC * TB, Hp).astype(bf16)
    logits = jnp.dot(hs, wo_ref[...], preferred_element_type=f32) + bo_ref[...]
    out_ref[...] = jnp.tanh(logits).reshape(TC, TB, Np).astype(out_ref.dtype)


# ------------------------------ params / glue ------------------------------
def make_quaternion_kernel(r, i, j, k):
    """(4*in_q, 4*out_q) real Hamilton-product matrix used by quaternion_linear."""
    row_r = jnp.concatenate([r, -i, -j, -k], axis=0)
    row_i = jnp.concatenate([i, r, -k, j], axis=0)
    row_j = jnp.concatenate([j, k, r, -i], axis=0)
    row_k = jnp.concatenate([k, -j, i, r], axis=0)
    return jnp.concatenate([row_r, row_i, row_j, row_k], axis=1)


def init_params(key, feat_size, hidden_size):
    assert feat_size % 4 == 0 and hidden_size % 4 == 0
    num_classes = feat_size                      # QRNN: self.num_classes = feat_size
    f32 = jnp.float32
    ks = jax.random.split(key, 10)

    def glorot(k, shape):
        s = 1.0 / jnp.sqrt(jnp.asarray(2.0 * (shape[0] + shape[1]), f32))
        return jax.random.normal(k, shape, f32) * s

    def quat_weight(keys, in_f, out_f):
        in_q, out_q = in_f // 4, out_f // 4
        r = glorot(keys[0], (in_q, out_q))
        i = glorot(keys[1], (in_q, out_q))
        j = glorot(keys[2], (in_q, out_q))
        k = glorot(keys[3], (in_q, out_q))
        return make_quaternion_kernel(r, i, j, k)          # (in_f, out_f)

    wx = quat_weight(ks[0:4], feat_size, hidden_size)       # wx: feat -> hidden
    wu = quat_weight(ks[4:8], hidden_size, hidden_size)     # uh: hidden -> hidden
    # fco: nn.Linear(curr_dim, num_classes).
    # TODO(synk): `curr_dim` is an undefined name in the original torch source; the
    # only shape-consistent choice is hidden_size, which is used here.
    wo = glorot(ks[8], (hidden_size, num_classes))           # stored transposed
    bo = jax.random.uniform(ks[9], (num_classes,), f32, minval=-0.1, maxval=0.1)
    # Both QuaternionLinearAutograd biases init to 0 in torch; fold into one vector.
    bxu = jnp.zeros((hidden_size,), f32)

    # lane-dense padding: hidden and num_classes rounded up to multiples of 128
    Hp = _round_up(hidden_size, 128)
    Np = _round_up(num_classes, 128)

    def pad2(w, rows, cols):
        return jnp.pad(w, ((0, rows - w.shape[0]), (0, cols - w.shape[1])))

    return dict(
        wx=pad2(wx, feat_size, Hp).astype(jnp.bfloat16),
        wu=pad2(wu, Hp, Hp).astype(jnp.bfloat16),
        wo=pad2(wo, Hp, Np).astype(jnp.bfloat16),
        bxu=jnp.pad(bxu, (0, Hp - hidden_size)).reshape(1, Hp),
        bo=jnp.pad(bo, (0, Np - num_classes)).reshape(1, Np),
        num_classes=num_classes,
        hidden=hidden_size,
    )


def qrnn_forward(x, params, *, batch_tile=None, seq_chunk=16,
                 single_buffer_weights=True, out_dtype=jnp.float32):
    """x: (seq, batch, feat_size)  ->  (seq, batch, num_classes)."""
    S, B, F = x.shape
    x = x.astype(jnp.bfloat16)            # halves the only streaming-input DMA

    wx, wu, wo = params["wx"], params["wu"], params["wo"]
    bxu, bo = params["bxu"], params["bo"]
    Hp, Np = wu.shape[0], wo.shape[1]
    N = params["num_classes"]

    # ---- batch tiling --------------------------------------------------------
    # small batch: single tile; mid batch: nb >= 2 so both v7x TensorCores get a
    # tile; large batch: TB = 256 to fill the 256-wide MXU on v6e/v7x.
    padB8 = _round_up(B, 8)
    if batch_tile is not None:
        TB = min(_round_up(batch_tile, 8), padB8)
    elif padB8 <= 128:
        TB = padB8
    elif padB8 <= 512:
        TB = _round_up(pl.cdiv(padB8, 2), 8)
    else:
        TB = 256
    padB = _round_up(padB8, TB)
    nb = padB // TB

    # ---- seq chunking --------------------------------------------------------
    TC = max(1, min(seq_chunk, S))
    padS = _round_up(S, TC)
    nchunks = padS // TC

    if (padS, padB) != (S, B):
        x = jnp.pad(x, ((0, padS - S), (0, padB - B), (0, 0)))

    # Resident weight/bias specs (constant index maps).  Single-buffer them when
    # pl.Buffered(1) is supported; otherwise fall back to default double buffering.
    wkw = {"pipeline_mode": pl.Buffered(1)} if single_buffer_weights else {}
    cmap = lambda b, c: (0, 0)

    grid_spec = pltpu.PrefetchScalarGridSpec(
        num_scalar_prefetch=0,
        grid=(nb, nchunks),
        in_specs=[
            pl.BlockSpec((TC, TB, F), lambda b, c: (c, b, 0)),   # x: streamed chunk
            pl.BlockSpec((F, Hp), cmap, **wkw),                  # Wx   (resident)
            pl.BlockSpec((1, Hp), cmap, **wkw),                  # bx+bu
            pl.BlockSpec((Hp, Hp), cmap, **wkw),                 # Wu   (resident)
            pl.BlockSpec((Hp, Np), cmap, **wkw),                 # Wo   (resident)
            pl.BlockSpec((1, Np), cmap, **wkw),                  # bo
        ],
        out_specs=pl.BlockSpec((TC, TB, Np), lambda b, c: (c, b, 0)),
        scratch_shapes=[pltpu.VMEM((TB, Hp), jnp.float32),       # recurrent h
                        pltpu.VMEM((TC, TB, Hp), jnp.float32)],  # chunk-local h_t
    )

    # ---- VMEM budget & cost estimate (padded shapes actually executed) -------
    out_isize = jnp.dtype(out_dtype).itemsize
    w_hbm_bytes = (wx.size + wu.size + wo.size) * 2 + (bxu.size + bo.size) * 4
    weight_vmem = w_hbm_bytes * (1 if single_buffer_weights else 2)
    tile_vmem = 2 * (TC * TB * F * 2 + TC * TB * Np * out_isize)   # double-buffered
    scratch_vmem = (TB * Hp + TC * TB * Hp) * 4
    vmem_limit = int(min(100 * 2**20,
                         2 * (weight_vmem + tile_vmem + scratch_vmem) + 16 * 2**20))
    # TODO(synk): for Hp >~ 3-4K on v7x (64 MiB VMEM), add a K-tile axis over Hp for
    # the Wu/Wo matmuls instead of keeping the full (Hp,Hp)/(Hp,Np) blocks resident.

    flops = 2 * padS * padB * (F * Hp + Hp * Hp + Hp * Np)
    transcendentals = padS * padB * Np
    bytes_accessed = (padS * padB * F * 2 + padS * padB * Np * out_isize
                      + w_hbm_bytes)

    out = pl.pallas_call(
        qrnn_kernel,
        out_shape=jax.ShapeDtypeStruct((padS, padB, Np), out_dtype),
        grid_spec=grid_spec,
        compiler_params=pltpu.CompilerParams(
            dimension_semantics=("parallel", "arbitrary"),
            vmem_limit_bytes=vmem_limit),
        cost_estimate=pl.CostEstimate(
            flops=flops, transcendentals=transcendentals,
            bytes_accessed=bytes_accessed),
    )(x, wx, bxu, wu, wo, bo)

    return out[:S, :B, :N]


# pure-JAX mirror (same bf16-operand / f32-accumulate math) for a sanity check
def qrnn_reference(x, params):
    S, B, F = x.shape
    f32, bf16 = jnp.float32, jnp.bfloat16
    mm = lambda a, w: jnp.dot(a.astype(bf16), w, preferred_element_type=f32)

    wx_out = mm(x.reshape(S * B, F), params["wx"]).reshape(S, B, -1) + params["bxu"]
    h = jnp.zeros((B, params["wu"].shape[0]), f32)
    outs = []
    for t in range(S):
        h = wx_out[t] + mm(h, params["wu"])
        outs.append(jnp.tanh(mm(h, params["wo"]) + params["bo"]))
    out = jnp.stack(outs, axis=0)
    return out[:, :, :params["num_classes"]]


if __name__ == "__main__":
    key = jax.random.PRNGKey(0)
    kx, kp = jax.random.split(key)

    # QRNN(feat_size, hidden_size, CUDA) consumes x of shape (seq, batch, feat).
    seq, batch, feat_size, hidden_size = 8, 8, 16, 32
    x = jax.random.normal(kx, (seq, batch, feat_size), jnp.float32)
    params = init_params(kp, feat_size, hidden_size)

    try:
        out = jax.block_until_ready(qrnn_forward(x, params))
    except Exception:
        # pl.Buffered(1) (single-buffered resident weights) not supported by this
        # jax/Mosaic version -> fall back to default double-buffered weight specs.
        out = jax.block_until_ready(
            qrnn_forward(x, params, single_buffer_weights=False))
    assert out.shape == (seq, batch, feat_size)

    ref = qrnn_reference(x, params)
    assert jnp.allclose(out, ref, atol=2e-3, rtol=2e-3), "mismatch vs reference"

    print("KERNEL_OK")
</pallas_src>

<mosaic_0001>
module attributes {stable_mosaic.version = 11 : i64} {
  func.func @qrnn_kernel(%arg0: i32, %arg1: i32, %arg2: memref<8x8x16xbf16, #tpu.memory_space<vmem>>, %arg3: memref<16x128xbf16, #tpu.memory_space<vmem>>, %arg4: memref<1x128xf32, #tpu.memory_space<vmem>>, %arg5: memref<128x128xbf16, #tpu.memory_space<vmem>>, %arg6: memref<128x128xbf16, #tpu.memory_space<vmem>>, %arg7: memref<1x128xf32, #tpu.memory_space<vmem>>, %arg8: memref<8x8x128xf32, #tpu.memory_space<vmem>>, %arg9: memref<8x128xf32, #tpu.memory_space<vmem>>, %arg10: memref<8x8x128xf32, #tpu.memory_space<vmem>>) attributes {dimension_semantics = [#tpu.dimension_semantics<parallel>, #tpu.dimension_semantics<arbitrary>], iteration_bounds = array<i64: 1, 1>, scalar_prefetch = 0 : i64, scratch_operands = 2 : i64, tpu.core_type = #tpu.core_type<tc>, window_params = [{transform_indices = @transform_0, window_bounds = array<i64: 8, 8, 16>}, {pipeline_mode = #tpu.pipeline_mode<synchronous>, transform_indices = @transform_1, window_bounds = array<i64: 16, 128>}, {pipeline_mode = #tpu.pipeline_mode<synchronous>, transform_indices = @transform_2, window_bounds = array<i64: 1, 128>}, {pipeline_mode = #tpu.pipeline_mode<synchronous>, transform_indices = @transform_3, window_bounds = array<i64: 128, 128>}, {pipeline_mode = #tpu.pipeline_mode<synchronous>, transform_indices = @transform_4, window_bounds = array<i64: 128, 128>}, {pipeline_mode = #tpu.pipeline_mode<synchronous>, transform_indices = @transform_5, window_bounds = array<i64: 1, 128>}, {transform_indices = @transform_6, window_bounds = array<i64: 8, 8, 128>}]} {
    %c0_i32 = arith.constant 0 : i32
    %0 = arith.cmpi eq, %arg1, %c0_i32 : i32
    %1 = arith.extui %0 : i1 to i32
    %c0_i32_0 = arith.constant 0 : i32
    %2 = arith.cmpi ne, %1, %c0_i32_0 : i32
    scf.if %2 {
      %cst_68 = arith.constant 0.000000e+00 : f32
      %106 = vector.broadcast %cst_68 : f32 to vector<8x128xf32>
      %c0_69 = arith.constant 0 : index
      %c0_70 = arith.constant 0 : index
      %107 = vector.load %arg9[%c0_69, %c0_70] : memref<8x128xf32, #tpu.memory_space<vmem>>, vector<8x128xf32>
      tpu.vector_store %arg9[%c0_69, %c0_70], %106 {strides = array<i32>} : memref<8x128xf32, #tpu.memory_space<vmem>>, vector<8x128xf32>,
    } else {
    }
    %c0 = arith.constant 0 : index
    %c0_1 = arith.constant 0 : index
    %c0_2 = arith.constant 0 : index
    %3 = vector.load %arg2[%c0, %c0_1, %c0_2] : memref<8x8x16xbf16, #tpu.memory_space<vmem>>, vector<8x8x16xbf16>
    %4 = vector.shape_cast %3 : vector<8x8x16xbf16> to vector<64x16xbf16>
    %c0_3 = arith.constant 0 : index
    %c0_4 = arith.constant 0 : index
    %5 = vector.load %arg3[%c0_3, %c0_4] : memref<16x128xbf16, #tpu.memory_space<vmem>>, vector<16x128xbf16>
    %cst = arith.constant dense<0.000000e+00> : vector<64x128xf32>
    %6 = tpu.matmul %4, %5, %cst {dimension_numbers = #tpu.dot_dimension_numbers<[1], [0], [0], [1], [0, 0, 1, 1], [], []>} : vector<64x16xbf16>, vector<16x128xbf16>, vector<64x128xf32> -> vector<64x128xf32>
    %c0_5 = arith.constant 0 : index
    %c0_6 = arith.constant 0 : index
    %7 = vector.load %arg4[%c0_5, %c0_6] : memref<1x128xf32, #tpu.memory_space<vmem>>, vector<1x128xf32>
    %8 = vector.broadcast %7 : vector<1x128xf32> to vector<64x128xf32>
    %9 = arith.addf %6, %8 : vector<64x128xf32>
    %10 = vector.shape_cast %9 : vector<64x128xf32> to vector<8x8x128xf32>
    %c0_7 = arith.constant 0 : index
    %c0_8 = arith.constant 0 : index
    %c0_9 = arith.constant 0 : index
    %11 = vector.load %arg10[%c0_7, %c0_8, %c0_9] : memref<8x8x128xf32, #tpu.memory_space<vmem>>, vector<8x8x128xf32>
    tpu.vector_store %arg10[%c0_7, %c0_8, %c0_9], %10 {strides = array<i32>} : memref<8x8x128xf32, #tpu.memory_space<vmem>>, vector<8x8x128xf32>,
    %c0_10 = arith.constant 0 : index
    %c0_11 = arith.constant 0 : index
    %12 = vector.load %arg5[%c0_10, %c0_11] : memref<128x128xbf16, #tpu.memory_space<vmem>>, vector<128x128xbf16>
    %c0_12 = arith.constant 0 : index
    %c0_13 = arith.constant 0 : index
    %13 = vector.load %arg9[%c0_12, %c0_13] : memref<8x128xf32, #tpu.memory_space<vmem>>, vector<8x128xf32>
    %c0_i32_14 = arith.constant 0 : i32
    %14 = arith.index_cast %c0_i32_14 : i32 to index
    %c0_15 = arith.constant 0 : index
    %c0_16 = arith.constant 0 : index
    %15 = vector.load %arg10[%14, %c0_15, %c0_16] : memref<8x8x128xf32, #tpu.memory_space<vmem>>, vector<1x8x128xf32>
    %16 = vector.shape_cast %15 : vector<1x8x128xf32> to vector<8x128xf32>
    %17 = arith.truncf %13 : vector<8x128xf32> to vector<8x128xbf16>
    %cst_17 = arith.constant dense<0.000000e+00> : vector<8x128xf32>
    %18 = tpu.matmul %17, %12, %cst_17 {dimension_numbers = #tpu.dot_dimension_numbers<[1], [0], [0], [1], [0, 0, 1, 1], [], []>} : vector<8x128xbf16>, vector<128x128xbf16>, vector<8x128xf32> -> vector<8x128xf32>
    %19 = arith.addf %16, %18 : vector<8x128xf32>
    %20 = arith.index_cast %c0_i32_14 : i32 to index
    %c0_18 = arith.constant 0 : index
    %c0_19 = arith.constant 0 : index
    %21 = vector.load %arg10[%20, %c0_18, %c0_19] : memref<8x8x128xf32, #tpu.memory_space<vmem>>, vector<1x8x128xf32>
    %22 = vector.shape_cast %21 : vector<1x8x128xf32> to vector<8x128xf32>
    %23 = vector.shape_cast %19 : vector<8x128xf32> to vector<1x8x128xf32>
    tpu.vector_store %arg10[%20, %c0_18, %c0_19], %23 {strides = array<i32>} : memref<8x8x128xf32, #tpu.memory_space<vmem>>, vector<1x8x128xf32>,
    %c1_i32 = arith.constant 1 : i32
    %24 = arith.index_cast %c1_i32 : i32 to index
    %c0_20 = arith.constant 0 : index
    %c0_21 = arith.constant 0 : index
    %25 = vector.load %arg10[%24, %c0_20, %c0_21] : memref<8x8x128xf32, #tpu.memory_space<vmem>>, vector<1x8x128xf32>
    %26 = vector.shape_cast %25 : vector<1x8x128xf32> to vector<8x128xf32>
    %27 = arith.truncf %19 : vector<8x128xf32> to vector<8x128xbf16>
    %cst_22 = arith.constant dense<0.000000e+00> : vector<8x128xf32>
    %28 = tpu.matmul %27, %12, %cst_22 {dimension_numbers = #tpu.dot_dimension_numbers<[1], [0], [0], [1], [0, 0, 1, 1], [], []>} : vector<8x128xbf16>, vector<128x128xbf16>, vector<8x128xf32> -> vector<8x128xf32>
    %29 = arith.addf %26, %28 : vector<8x128xf32>
    %30 = arith.index_cast %c1_i32 : i32 to index
    %c0_23 = arith.constant 0 : index
    %c0_24 = arith.constant 0 : index
    %31 = vector.load %arg10[%30, %c0_23, %c0_24] : memref<8x8x128xf32, #tpu.memory_space<vmem>>, vector<1x8x128xf32>
    %32 = vector.shape_cast %31 : vector<1x8x128xf32> to vector<8x128xf32>
    %33 = vector.shape_cast %29 : vector<8x128xf32> to vector<1x8x128xf32>
    tpu.vector_store %arg10[%30, %c0_23, %c0_24], %33 {strides = array<i32>} : memref<8x8x128xf32, #tpu.memory_space<vmem>>, vector<1x8x128xf32>,
    %c2_i32 = arith.constant 2 : i32
    %34 = arith.index_cast %c2_i32 : i32 to index
    %c0_25 = arith.constant 0 : index
    %c0_26 = arith.constant 0 : index
    %35 = vector.load %arg10[%34, %c0_25, %c0_26] : memref<8x8x128xf32, #tpu.memory_space<vmem>>, vector<1x8x128xf32>
    %36 = vector.shape_cast %35 : vector<1x8x128xf32> to vector<8x128xf32>
    %37 = arith.truncf %29 : vector<8x128xf32> to vector<8x128xbf16>
    %cst_27 = arith.constant dense<0.000000e+00> : vector<8x128xf32>
    %38 = tpu.matmul %37, %12, %cst_27 {dimension_numbers = #tpu.dot_dimension_numbers<[1], [0], [0], [1], [0, 0, 1, 1], [], []>} : vector<8x128xbf16>, vector<128x128xbf16>, vector<8x128xf32> -> vector<8x128xf32>
    %39 = arith.addf %36, %38 : vector<8x128xf32>
    %40 = arith.index_cast %c2_i32 : i32 to index
    %c0_28 = arith.constant 0 : index
    %c0_29 = arith.constant 0 : index
    %41 = vector.load %arg10[%40, %c0_28, %c0_29] : memref<8x8x128xf32, #tpu.memory_space<vmem>>, vector<1x8x128xf32>
    %42 = vector.shape_cast %41 : vector<1x8x128xf32> to vector<8x128xf32>
    %43 = vector.shape_cast %39 : vector<8x128xf32> to vector<1x8x128xf32>
    tpu.vector_store %arg10[%40, %c0_28, %c0_29], %43 {strides = array<i32>} : memref<8x8x128xf32, #tpu.memory_space<vmem>>, vector<1x8x128xf32>,
    %c3_i32 = arith.constant 3 : i32
    %44 = arith.index_cast %c3_i32 : i32 to index
    %c0_30 = arith.constant 0 : index
    %c0_31 = arith.constant 0 : index
    %45 = vector.load %arg10[%44, %c0_30, %c0_31] : memref<8x8x128xf32, #tpu.memory_space<vmem>>, vector<1x8x128xf32>
    %46 = vector.shape_cast %45 : vector<1x8x128xf32> to vector<8x128xf32>
    %47 = arith.truncf %39 : vector<8x128xf32> to vector<8x128xbf16>
    %cst_32 = arith.constant dense<0.000000e+00> : vector<8x128xf32>
    %48 = tpu.matmul %47, %12, %cst_32 {dimension_numbers = #tpu.dot_dimension_numbers<[1], [0], [0], [1], [0, 0, 1, 1], [], []>} : vector<8x128xbf16>, vector<128x128xbf16>, vector<8x128xf32> -> vector<8x128xf32>
    %49 = arith.addf %46, %48 : vector<8x128xf32>
    %50 = arith.index_cast %c3_i32 : i32 to index
    %c0_33 = arith.constant 0 : index
    %c0_34 = arith.constant 0 : index
    %51 = vector.load %arg10[%50, %c0_33, %c0_34] : memref<8x8x128xf32, #tpu.memory_space<vmem>>, vector<1x8x128xf32>
    %52 = vector.shape_cast %51 : vector<1x8x128xf32> to vector<8x128xf32>
    %53 = vector.shape_cast %49 : vector<8x128xf32> to vector<1x8x128xf32>
    tpu.vector_store %arg10[%50, %c0_33, %c0_34], %53 {strides = array<i32>} : memref<8x8x128xf32, #tpu.memory_space<vmem>>, vector<1x8x128xf32>,
    %c4_i32 = arith.constant 4 : i32
    %54 = arith.index_cast %c4_i32 : i32 to index
    %c0_35 = arith.constant 0 : index
    %c0_36 = arith.constant 0 : index
    %55 = vector.load %arg10[%54, %c0_35, %c0_36] : memref<8x8x128xf32, #tpu.memory_space<vmem>>, vector<1x8x128xf32>
    %56 = vector.shape_cast %55 : vector<1x8x128xf32> to vector<8x128xf32>
    %57 = arith.truncf %49 : vector<8x128xf32> to vector<8x128xbf16>
    %cst_37 = arith.constant dense<0.000000e+00> : vector<8x128xf32>
    %58 = tpu.matmul %57, %12, %cst_37 {dimension_numbers = #tpu.dot_dimension_numbers<[1], [0], [0], [1], [0, 0, 1, 1], [], []>} : vector<8x128xbf16>, vector<128x128xbf16>, vector<8x128xf32> -> vector<8x128xf32>
    %59 = arith.addf %56, %58 : vector<8x128xf32>
    %60 = arith.index_cast %c4_i32 : i32 to index
    %c0_38 = arith.constant 0 : index
    %c0_39 = arith.constant 0 : index
    %61 = vector.load %arg10[%60, %c0_38, %c0_39] : memref<8x8x128xf32, #tpu.memory_space<vmem>>, vector<1x8x128xf32>
    %62 = vector.shape_cast %61 : vector<1x8x128xf32> to vector<8x128xf32>
    %63 = vector.shape_cast %59 : vector<8x128xf32> to vector<1x8x128xf32>
    tpu.vector_store %arg10[%60, %c0_38, %c0_39], %63 {strides = array<i32>} : memref<8x8x128xf32, #tpu.memory_space<vmem>>, vector<1x8x128xf32>,
    %c5_i32 = arith.constant 5 : i32
    %64 = arith.index_cast %c5_i32 : i32 to index
    %c0_40 = arith.constant 0 : index
    %c0_41 = arith.constant 0 : index
    %65 = vector.load %arg10[%64, %c0_40, %c0_41] : memref<8x8x128xf32, #tpu.memory_space<vmem>>, vector<1x8x128xf32>
    %66 = vector.shape_cast %65 : vector<1x8x128xf32> to vector<8x128xf32>
    %67 = arith.truncf %59 : vector<8x128xf32> to vector<8x128xbf16>
    %cst_42 = arith.constant dense<0.000000e+00> : vector<8x128xf32>
    %68 = tpu.matmul %67, %12, %cst_42 {dimension_numbers = #tpu.dot_dimension_numbers<[1], [0], [0], [1], [0, 0, 1, 1], [], []>} : vector<8x128xbf16>, vector<128x128xbf16>, vector<8x128xf32> -> vector<8x128xf32>
    %69 = arith.addf %66, %68 : vector<8x128xf32>
    %70 = arith.index_cast %c5_i32 : i32 to index
    %c0_43 = arith.constant 0 : index
    %c0_44 = arith.constant 0 : index
    %71 = vector.load %arg10[%70, %c0_43, %c0_44] : memref<8x8x128xf32, #tpu.memory_space<vmem>>, vector<1x8x128xf32>
    %72 = vector.shape_cast %71 : vector<1x8x128xf32> to vector<8x128xf32>
    %73 = vector.shape_cast %69 : vector<8x128xf32> to vector<1x8x128xf32>
    tpu.vector_store %arg10[%70, %c0_43, %c0_44], %73 {strides = array<i32>} : memref<8x8x128xf32, #tpu.memory_space<vmem>>, vector<1x8x128xf32>,
    %c6_i32 = arith.constant 6 : i32
    %74 = arith.index_cast %c6_i32 : i32 to index
    %c0_45 = arith.constant 0 : index
    %c0_46 = arith.constant 0 : index
    %75 = vector.load %arg10[%74, %c0_45, %c0_46] : memref<8x8x128xf32, #tpu.memory_space<vmem>>, vector<1x8x128xf32>
    %76 = vector.shape_cast %75 : vector<1x8x128xf32> to vector<8x128xf32>
    %77 = arith.truncf %69 : vector<8x128xf32> to vector<8x128xbf16>
    %cst_47 = arith.constant dense<0.000000e+00> : vector<8x128xf32>
    %78 = tpu.matmul %77, %12, %cst_47 {dimension_numbers = #tpu.dot_dimension_numbers<[1], [0], [0], [1], [0, 0, 1, 1], [], []>} : vector<8x128xbf16>, vector<128x128xbf16>, vector<8x128xf32> -> vector<8x128xf32>
    %79 = arith.addf %76, %78 : vector<8x128xf32>
    %80 = arith.index_cast %c6_i32 : i32 to index
    %c0_48 = arith.constant 0 : index
    %c0_49 = arith.constant 0 : index
    %81 = vector.load %arg10[%80, %c0_48, %c0_49] : memref<8x8x128xf32, #tpu.memory_space<vmem>>, vector<1x8x128xf32>
    %82 = vector.shape_cast %81 : vector<1x8x128xf32> to vector<8x128xf32>
    %83 = vector.shape_cast %79 : vector<8x128xf32> to vector<1x8x128xf32>
    tpu.vector_store %arg10[%80, %c0_48, %c0_49], %83 {strides = array<i32>} : memref<8x8x128xf32, #tpu.memory_space<vmem>>, vector<1x8x128xf32>,
    %c7_i32 = arith.constant 7 : i32
    %84 = arith.index_cast %c7_i32 : i32 to index
    %c0_50 = arith.constant 0 : index
    %c0_51 = arith.constant 0 : index
    %85 = vector.load %arg10[%84, %c0_50, %c0_51] : memref<8x8x128xf32, #tpu.memory_space<vmem>>, vector<1x8x128xf32>
    %86 = vector.shape_cast %85 : vector<1x8x128xf32> to vector<8x128xf32>
    %87 = arith.truncf %79 : vector<8x128xf32> to vector<8x128xbf16>
    %cst_52 = arith.constant dense<0.000000e+00> : vector<8x128xf32>
    %88 = tpu.matmul %87, %12, %cst_52 {dimension_numbers = #tpu.dot_dimension_numbers<[1], [0], [0], [1], [0, 0, 1, 1], [], []>} : vector<8x128xbf16>, vector<128x128xbf16>, vector<8x128xf32> -> vector<8x128xf32>
    %89 = arith.addf %86, %88 : vector<8x128xf32>
    %90 = arith.index_cast %c7_i32 : i32 to index
    %c0_53 = arith.constant 0 : index
    %c0_54 = arith.constant 0 : index
    %91 = vector.load %arg10[%90, %c0_53, %c0_54] : memref<8x8x128xf32, #tpu.memory_space<vmem>>, vector<1x8x128xf32>
    %92 = vector.shape_cast %91 : vector<1x8x128xf32> to vector<8x128xf32>
    %93 = vector.shape_cast %89 : vector<8x128xf32> to vector<1x8x128xf32>
    tpu.vector_store %arg10[%90, %c0_53, %c0_54], %93 {strides = array<i32>} : memref<8x8x128xf32, #tpu.memory_space<vmem>>, vector<1x8x128xf32>,
    %c8_i32 = arith.constant 8 : i32
    %c0_55 = arith.constant 0 : index
    %c0_56 = arith.constant 0 : index
    %94 = vector.load %arg9[%c0_55, %c0_56] : memref<8x128xf32, #tpu.memory_space<vmem>>, vector<8x128xf32>
    tpu.vector_store %arg9[%c0_55, %c0_56], %89 {strides = array<i32>} : memref<8x128xf32, #tpu.memory_space<vmem>>, vector<8x128xf32>,
    %c0_57 = arith.constant 0 : index
    %c0_58 = arith.constant 0 : index
    %c0_59 = arith.constant 0 : index
    %95 = vector.load %arg10[%c0_57, %c0_58, %c0_59] : memref<8x8x128xf32, #tpu.memory_space<vmem>>, vector<8x8x128xf32>
    %96 = vector.shape_cast %95 : vector<8x8x128xf32> to vector<64x128xf32>
    %97 = arith.truncf %96 : vector<64x128xf32> to vector<64x128xbf16>
    %c0_60 = arith.constant 0 : index
    %c0_61 = arith.constant 0 : index
    %98 = vector.load %arg6[%c0_60, %c0_61] : memref<128x128xbf16, #tpu.memory_space<vmem>>, vector<128x128xbf16>
    %cst_62 = arith.constant dense<0.000000e+00> : vector<64x128xf32>
    %99 = tpu.matmul %97, %98, %cst_62 {dimension_numbers = #tpu.dot_dimension_numbers<[1], [0], [0], [1], [0, 0, 1, 1], [], []>} : vector<64x128xbf16>, vector<128x128xbf16>, vector<64x128xf32> -> vector<64x128xf32>
    %c0_63 = arith.constant 0 : index
    %c0_64 = arith.constant 0 : index
    %100 = vector.load %arg7[%c0_63, %c0_64] : memref<1x128xf32, #tpu.memory_space<vmem>>, vector<1x128xf32>
    %101 = vector.broadcast %100 : vector<1x128xf32> to vector<64x128xf32>
    %102 = arith.addf %99, %101 : vector<64x128xf32>
    %103 = math.tanh %102 : vector<64x128xf32>
    %104 = vector.shape_cast %103 : vector<64x128xf32> to vector<8x8x128xf32>
    %c0_65 = arith.constant 0 : index
    %c0_66 = arith.constant 0 : index
    %c0_67 = arith.constant 0 : index
    %105 = vector.load %arg8[%c0_65, %c0_66, %c0_67] : memref<8x8x128xf32, #tpu.memory_space<vmem>>, vector<8x8x128xf32>
    tpu.vector_store %arg8[%c0_65, %c0_66, %c0_67], %104 {strides = array<i32>} : memref<8x8x128xf32, #tpu.memory_space<vmem>>, vector<8x8x128xf32>,
    return
  }
  func.func @transform_0(%arg0: i32, %arg1: i32) -> (i32, i32, i32) {
    %c0_i32 = arith.constant 0 : i32
    %c0_i32_0 = arith.constant 0 : i32
    return %arg1, %arg0, %c0_i32 : i32, i32, i32
  }
  func.func @transform_1(%arg0: i32, %arg1: i32) -> (i32, i32) {
    %c0_i32 = arith.constant 0 : i32
    %c0_i32_0 = arith.constant 0 : i32
    %c0_i32_1 = arith.constant 0 : i32
    return %c0_i32, %c0_i32_0 : i32, i32
  }
  func.func @transform_2(%arg0: i32, %arg1: i32) -> (i32, i32) {
    %c0_i32 = arith.constant 0 : i32
    %c0_i32_0 = arith.constant 0 : i32
    %c0_i32_1 = arith.constant 0 : i32
    return %c0_i32, %c0_i32_0 : i32, i32
  }
  func.func @transform_3(%arg0: i32, %arg1: i32) -> (i32, i32) {
    %c0_i32 = arith.constant 0 : i32
    %c0_i32_0 = arith.constant 0 : i32
    %c0_i32_1 = arith.constant 0 : i32
    return %c0_i32, %c0_i32_0 : i32, i32
  }
  func.func @transform_4(%arg0: i32, %arg1: i32) -> (i32, i32) {
    %c0_i32 = arith.constant 0 : i32
    %c0_i32_0 = arith.constant 0 : i32
    %c0_i32_1 = arith.constant 0 : i32
    return %c0_i32, %c0_i32_0 : i32, i32
  }
  func.func @transform_5(%arg0: i32, %arg1: i32) -> (i32, i32) {
    %c0_i32 = arith.constant 0 : i32
    %c0_i32_0 = arith.constant 0 : i32
    %c0_i32_1 = arith.constant 0 : i32
    return %c0_i32, %c0_i32_0 : i32, i32
  }
  func.func @transform_6(%arg0: i32, %arg1: i32) -> (i32, i32, i32) {
    %c0_i32 = arith.constant 0 : i32
    %c0_i32_0 = arith.constant 0 : i32
    return %arg1, %arg0, %c0_i32 : i32, i32, i32
  }
}

module attributes {stable_mosaic.version = 11 : i64} {
  func.func @qrnn_kernel(%arg0: i32, %arg1: i32, %arg2: memref<8x8x16xbf16, #tpu.memory_space<vmem>>, %arg3: memref<16x128xbf16, #tpu.memory_space<vmem>>, %arg4: memref<1x128xf32, #tpu.memory_space<vmem>>, %arg5: memref<128x128xbf16, #tpu.memory_space<vmem>>, %arg6: memref<128x128xbf16, #tpu.memory_space<vmem>>, %arg7: memref<1x128xf32, #tpu.memory_space<vmem>>, %arg8: memref<8x8x128xf32, #tpu.memory_space<vmem>>, %arg9: memref<8x128xf32, #tpu.memory_space<vmem>>, %arg10: memref<8x8x128xf32, #tpu.memory_space<vmem>>) attributes {dimension_semantics = [#tpu.dimension_semantics<parallel>, #tpu.dimension_semantics<arbitrary>], iteration_bounds = array<i64: 1, 1>, scalar_prefetch = 0 : i64, scratch_operands = 2 : i64, tpu.core_type = #tpu.core_type<tc>, window_params = [{transform_indices = @transform_0, window_bounds = array<i64: 8, 8, 16>}, {pipeline_mode = #tpu.pipeline_mode<synchronous>, transform_indices = @transform_1, window_bounds = array<i64: 16, 128>}, {pipeline_mode = #tpu.pipeline_mode<synchronous>, transform_indices = @transform_2, window_bounds = array<i64: 1, 128>}, {pipeline_mode = #tpu.pipeline_mode<synchronous>, transform_indices = @transform_3, window_bounds = array<i64: 128, 128>}, {pipeline_mode = #tpu.pipeline_mode<synchronous>, transform_indices = @transform_4, window_bounds = array<i64: 128, 128>}, {pipeline_mode = #tpu.pipeline_mode<synchronous>, transform_indices = @transform_5, window_bounds = array<i64: 1, 128>}, {transform_indices = @transform_6, window_bounds = array<i64: 8, 8, 128>}]} {
    %c0_i32 = arith.constant 0 : i32
    %0 = arith.cmpi eq, %arg1, %c0_i32 : i32
    %1 = arith.extui %0 : i1 to i32
    %c0_i32_0 = arith.constant 0 : i32
    %2 = arith.cmpi ne, %1, %c0_i32_0 : i32
    scf.if %2 {
      %cst_68 = arith.constant 0.000000e+00 : f32
      %106 = vector.broadcast %cst_68 : f32 to vector<8x128xf32>
      %c0_69 = arith.constant 0 : index
      %c0_70 = arith.constant 0 : index
      %107 = vector.load %arg9[%c0_69, %c0_70] : memref<8x128xf32, #tpu.memory_space<vmem>>, vector<8x128xf32>
      tpu.vector_store %arg9[%c0_69, %c0_70], %106 {strides = array<i32>} : memref<8x128xf32, #tpu.memory_space<vmem>>, vector<8x128xf32>,
    } else {
    }
    %c0 = arith.constant 0 : index
    %c0_1 = arith.constant 0 : index
    %c0_2 = arith.constant 0 : index
    %3 = vector.load %arg2[%c0, %c0_1, %c0_2] : memref<8x8x16xbf16, #tpu.memory_space<vmem>>, vector<8x8x16xbf16>
    %4 = vector.shape_cast %3 : vector<8x8x16xbf16> to vector<64x16xbf16>
    %c0_3 = arith.constant 0 : index
    %c0_4 = arith.constant 0 : index
    %5 = vector.load %arg3[%c0_3, %c0_4] : memref<16x128xbf16, #tpu.memory_space<vmem>>, vector<16x128xbf16>
    %cst = arith.constant dense<0.000000e+00> : vector<64x128xf32>
    %6 = tpu.matmul %4, %5, %cst {dimension_numbers = #tpu.dot_dimension_numbers<[1], [0], [0], [1], [0, 0, 1, 1], [], []>} : vector<64x16xbf16>, vector<16x128xbf16>, vector<64x128xf32> -> vector<64x128xf32>
    %c0_5 = arith.constant 0 : index
    %c0_6 = arith.constant 0 : index
    %7 = vector.load %arg4[%c0_5, %c0_6] : memref<1x128xf32, #tpu.memory_space<vmem>>, vector<1x128xf32>
    %8 = vector.broadcast %7 : vector<1x128xf32> to vector<64x128xf32>
    %9 = arith.addf %6, %8 : vector<64x128xf32>
    %10 = vector.shape_cast %9 : vector<64x128xf32> to vector<8x8x128xf32>
    %c0_7 = arith.constant 0 : index
    %c0_8 = arith.constant 0 : index
    %c0_9 = arith.constant 0 : index
    %11 = vector.load %arg10[%c0_7, %c0_8, %c0_9] : memref<8x8x128xf32, #tpu.memory_space<vmem>>, vector<8x8x128xf32>
    tpu.vector_store %arg10[%c0_7, %c0_8, %c0_9], %10 {strides = array<i32>} : memref<8x8x128xf32, #tpu.memory_space<vmem>>, vector<8x8x128xf32>,
    %c0_10 = arith.constant 0 : index
    %c0_11 = arith.constant 0 : index
    %12 = vector.load %arg5[%c0_10, %c0_11] : memref<128x128xbf16, #tpu.memory_space<vmem>>, vector<128x128xbf16>
    %c0_12 = arith.constant 0 : index
    %c0_13 = arith.constant 0 : index
    %13 = vector.load %arg9[%c0_12, %c0_13] : memref<8x128xf32, #tpu.memory_space<vmem>>, vector<8x128xf32>
    %c0_i32_14 = arith.constant 0 : i32
    %14 = arith.index_cast %c0_i32_14 : i32 to index
    %c0_15 = arith.constant 0 : index
    %c0_16 = arith.constant 0 : index
    %15 = vector.load %arg10[%14, %c0_15, %c0_16] : memref<8x8x128xf32, #tpu.memory_space<vmem>>, vector<1x8x128xf32>
    %16 = vector.shape_cast %15 : vector<1x8x128xf32> to vector<8x128xf32>
    %17 = arith.truncf %13 : vector<8x128xf32> to vector<8x128xbf16>
    %cst_17 = arith.constant dense<0.000000e+00> : vector<8x128xf32>
    %18 = tpu.matmul %17, %12, %cst_17 {dimension_numbers = #tpu.dot_dimension_numbers<[1], [0], [0], [1], [0, 0, 1, 1], [], []>} : vector<8x128xbf16>, vector<128x128xbf16>, vector<8x128xf32> -> vector<8x128xf32>
    %19 = arith.addf %16, %18 : vector<8x128xf32>
    %20 = arith.index_cast %c0_i32_14 : i32 to index
    %c0_18 = arith.constant 0 : index
    %c0_19 = arith.constant 0 : index
    %21 = vector.load %arg10[%20, %c0_18, %c0_19] : memref<8x8x128xf32, #tpu.memory_space<vmem>>, vector<1x8x128xf32>
    %22 = vector.shape_cast %21 : vector<1x8x128xf32> to vector<8x128xf32>
    %23 = vector.shape_cast %19 : vector<8x128xf32> to vector<1x8x128xf32>
    tpu.vector_store %arg10[%20, %c0_18, %c0_19], %23 {strides = array<i32>} : memref<8x8x128xf32, #tpu.memory_space<vmem>>, vector<1x8x128xf32>,
    %c1_i32 = arith.constant 1 : i32
    %24 = arith.index_cast %c1_i32 : i32 to index
    %c0_20 = arith.constant 0 : index
    %c0_21 = arith.constant 0 : index
    %25 = vector.load %arg10[%24, %c0_20, %c0_21] : memref<8x8x128xf32, #tpu.memory_space<vmem>>, vector<1x8x128xf32>
    %26 = vector.shape_cast %25 : vector<1x8x128xf32> to vector<8x128xf32>
    %27 = arith.truncf %19 : vector<8x128xf32> to vector<8x128xbf16>
    %cst_22 = arith.constant dense<0.000000e+00> : vector<8x128xf32>
    %28 = tpu.matmul %27, %12, %cst_22 {dimension_numbers = #tpu.dot_dimension_numbers<[1], [0], [0], [1], [0, 0, 1, 1], [], []>} : vector<8x128xbf16>, vector<128x128xbf16>, vector<8x128xf32> -> vector<8x128xf32>
    %29 = arith.addf %26, %28 : vector<8x128xf32>
    %30 = arith.index_cast %c1_i32 : i32 to index
    %c0_23 = arith.constant 0 : index
    %c0_24 = arith.constant 0 : index
    %31 = vector.load %arg10[%30, %c0_23, %c0_24] : memref<8x8x128xf32, #tpu.memory_space<vmem>>, vector<1x8x128xf32>
    %32 = vector.shape_cast %31 : vector<1x8x128xf32> to vector<8x128xf32>
    %33 = vector.shape_cast %29 : vector<8x128xf32> to vector<1x8x128xf32>
    tpu.vector_store %arg10[%30, %c0_23, %c0_24], %33 {strides = array<i32>} : memref<8x8x128xf32, #tpu.memory_space<vmem>>, vector<1x8x128xf32>,
    %c2_i32 = arith.constant 2 : i32
    %34 = arith.index_cast %c2_i32 : i32 to index
    %c0_25 = arith.constant 0 : index
    %c0_26 = arith.constant 0 : index
    %35 = vector.load %arg10[%34, %c0_25, %c0_26] : memref<8x8x128xf32, #tpu.memory_space<vmem>>, vector<1x8x128xf32>
    %36 = vector.shape_cast %35 : vector<1x8x128xf32> to vector<8x128xf32>
    %37 = arith.truncf %29 : vector<8x128xf32> to vector<8x128xbf16>
    %cst_27 = arith.constant dense<0.000000e+00> : vector<8x128xf32>
    %38 = tpu.matmul %37, %12, %cst_27 {dimension_numbers = #tpu.dot_dimension_numbers<[1], [0], [0], [1], [0, 0, 1, 1], [], []>} : vector<8x128xbf16>, vector<128x128xbf16>, vector<8x128xf32> -> vector<8x128xf32>
    %39 = arith.addf %36, %38 : vector<8x128xf32>
    %40 = arith.index_cast %c2_i32 : i32 to index
    %c0_28 = arith.constant 0 : index
    %c0_29 = arith.constant 0 : index
    %41 = vector.load %arg10[%40, %c0_28, %c0_29] : memref<8x8x128xf32, #tpu.memory_space<vmem>>, vector<1x8x128xf32>
    %42 = vector.shape_cast %41 : vector<1x8x128xf32> to vector<8x128xf32>
    %43 = vector.shape_cast %39 : vector<8x128xf32> to vector<1x8x128xf32>
    tpu.vector_store %arg10[%40, %c0_28, %c0_29], %43 {strides = array<i32>} : memref<8x8x128xf32, #tpu.memory_space<vmem>>, vector<1x8x128xf32>,
    %c3_i32 = arith.constant 3 : i32
    %44 = arith.index_cast %c3_i32 : i32 to index
    %c0_30 = arith.constant 0 : index
    %c0_31 = arith.constant 0 : index
    %45 = vector.load %arg10[%44, %c0_30, %c0_31] : memref<8x8x128xf32, #tpu.memory_space<vmem>>, vector<1x8x128xf32>
    %46 = vector.shape_cast %45 : vector<1x8x128xf32> to vector<8x128xf32>
    %47 = arith.truncf %39 : vector<8x128xf32> to vector<8x128xbf16>
    %cst_32 = arith.constant dense<0.000000e+00> : vector<8x128xf32>
    %48 = tpu.matmul %47, %12, %cst_32 {dimension_numbers = #tpu.dot_dimension_numbers<[1], [0], [0], [1], [0, 0, 1, 1], [], []>} : vector<8x128xbf16>, vector<128x128xbf16>, vector<8x128xf32> -> vector<8x128xf32>
    %49 = arith.addf %46, %48 : vector<8x128xf32>
    %50 = arith.index_cast %c3_i32 : i32 to index
    %c0_33 = arith.constant 0 : index
    %c0_34 = arith.constant 0 : index
    %51 = vector.load %arg10[%50, %c0_33, %c0_34] : memref<8x8x128xf32, #tpu.memory_space<vmem>>, vector<1x8x128xf32>
    %52 = vector.shape_cast %51 : vector<1x8x128xf32> to vector<8x128xf32>
    %53 = vector.shape_cast %49 : vector<8x128xf32> to vector<1x8x128xf32>
    tpu.vector_store %arg10[%50, %c0_33, %c0_34], %53 {strides = array<i32>} : memref<8x8x128xf32, #tpu.memory_space<vmem>>, vector<1x8x128xf32>,
    %c4_i32 = arith.constant 4 : i32
    %54 = arith.index_cast %c4_i32 : i32 to index
    %c0_35 = arith.constant 0 : index
    %c0_36 = arith.constant 0 : index
    %55 = vector.load %arg10[%54, %c0_35, %c0_36] : memref<8x8x128xf32, #tpu.memory_space<vmem>>, vector<1x8x128xf32>
    %56 = vector.shape_cast %55 : vector<1x8x128xf32> to vector<8x128xf32>
    %57 = arith.truncf %49 : vector<8x128xf32> to vector<8x128xbf16>
    %cst_37 = arith.constant dense<0.000000e+00> : vector<8x128xf32>
    %58 = tpu.matmul %57, %12, %cst_37 {dimension_numbers = #tpu.dot_dimension_numbers<[1], [0], [0], [1], [0, 0, 1, 1], [], []>} : vector<8x128xbf16>, vector<128x128xbf16>, vector<8x128xf32> -> vector<8x128xf32>
    %59 = arith.addf %56, %58 : vector<8x128xf32>
    %60 = arith.index_cast %c4_i32 : i32 to index
    %c0_38 = arith.constant 0 : index
    %c0_39 = arith.constant 0 : index
    %61 = vector.load %arg10[%60, %c0_38, %c0_39] : memref<8x8x128xf32, #tpu.memory_space<vmem>>, vector<1x8x128xf32>
    %62 = vector.shape_cast %61 : vector<1x8x128xf32> to vector<8x128xf32>
    %63 = vector.shape_cast %59 : vector<8x128xf32> to vector<1x8x128xf32>
    tpu.vector_store %arg10[%60, %c0_38, %c0_39], %63 {strides = array<i32>} : memref<8x8x128xf32, #tpu.memory_space<vmem>>, vector<1x8x128xf32>,
    %c5_i32 = arith.constant 5 : i32
    %64 = arith.index_cast %c5_i32 : i32 to index
    %c0_40 = arith.constant 0 : index
    %c0_41 = arith.constant 0 : index
    %65 = vector.load %arg10[%64, %c0_40, %c0_41] : memref<8x8x128xf32, #tpu.memory_space<vmem>>, vector<1x8x128xf32>
    %66 = vector.shape_cast %65 : vector<1x8x128xf32> to vector<8x128xf32>
    %67 = arith.truncf %59 : vector<8x128xf32> to vector<8x128xbf16>
    %cst_42 = arith.constant dense<0.000000e+00> : vector<8x128xf32>
    %68 = tpu.matmul %67, %12, %cst_42 {dimension_numbers = #tpu.dot_dimension_numbers<[1], [0], [0], [1], [0, 0, 1, 1], [], []>} : vector<8x128xbf16>, vector<128x128xbf16>, vector<8x128xf32> -> vector<8x128xf32>
    %69 = arith.addf %66, %68 : vector<8x128xf32>
    %70 = arith.index_cast %c5_i32 : i32 to index
    %c0_43 = arith.constant 0 : index
    %c0_44 = arith.constant 0 : index
    %71 = vector.load %arg10[%70, %c0_43, %c0_44] : memref<8x8x128xf32, #tpu.memory_space<vmem>>, vector<1x8x128xf32>
    %72 = vector.shape_cast %71 : vector<1x8x128xf32> to vector<8x128xf32>
    %73 = vector.shape_cast %69 : vector<8x128xf32> to vector<1x8x128xf32>
    tpu.vector_store %arg10[%70, %c0_43, %c0_44], %73 {strides = array<i32>} : memref<8x8x128xf32, #tpu.memory_space<vmem>>, vector<1x8x128xf32>,
    %c6_i32 = arith.constant 6 : i32
    %74 = arith.index_cast %c6_i32 : i32 to index
    %c0_45 = arith.constant 0 : index
    %c0_46 = arith.constant 0 : index
    %75 = vector.load %arg10[%74, %c0_45, %c0_46] : memref<8x8x128xf32, #tpu.memory_space<vmem>>, vector<1x8x128xf32>
    %76 = vector.shape_cast %75 : vector<1x8x128xf32> to vector<8x128xf32>
    %77 = arith.truncf %69 : vector<8x128xf32> to vector<8x128xbf16>
    %cst_47 = arith.constant dense<0.000000e+00> : vector<8x128xf32>
    %78 = tpu.matmul %77, %12, %cst_47 {dimension_numbers = #tpu.dot_dimension_numbers<[1], [0], [0], [1], [0, 0, 1, 1], [], []>} : vector<8x128xbf16>, vector<128x128xbf16>, vector<8x128xf32> -> vector<8x128xf32>
    %79 = arith.addf %76, %78 : vector<8x128xf32>
    %80 = arith.index_cast %c6_i32 : i32 to index
    %c0_48 = arith.constant 0 : index
    %c0_49 = arith.constant 0 : index
    %81 = vector.load %arg10[%80, %c0_48, %c0_49] : memref<8x8x128xf32, #tpu.memory_space<vmem>>, vector<1x8x128xf32>
    %82 = vector.shape_cast %81 : vector<1x8x128xf32> to vector<8x128xf32>
    %83 = vector.shape_cast %79 : vector<8x128xf32> to vector<1x8x128xf32>
    tpu.vector_store %arg10[%80, %c0_48, %c0_49], %83 {strides = array<i32>} : memref<8x8x128xf32, #tpu.memory_space<vmem>>, vector<1x8x128xf32>,
    %c7_i32 = arith.constant 7 : i32
    %84 = arith.index_cast %c7_i32 : i32 to index
    %c0_50 = arith.constant 0 : index
    %c0_51 = arith.constant 0 : index
    %85 = vector.load %arg10[%84, %c0_50, %c0_51] : memref<8x8x128xf32, #tpu.memory_space<vmem>>, vector<1x8x128xf32>
    %86 = vector.shape_cast %85 : vector<1x8x128xf32> to vector<8x128xf32>
    %87 = arith.truncf %79 : vector<8x128xf32> to vector<8x128xbf16>
    %cst_52 = arith.constant dense<0.000000e+00> : vector<8x128xf32>
    %88 = tpu.matmul %87, %12, %cst_52 {dimension_numbers = #tpu.dot_dimension_numbers<[1], [0], [0], [1], [0, 0, 1, 1], [], []>} : vector<8x128xbf16>, vector<128x128xbf16>, vector<8x128xf32> -> vector<8x128xf32>
    %89 = arith.addf %86, %88 : vector<8x128xf32>
    %90 = arith.index_cast %c7_i32 : i32 to index
    %c0_53 = arith.constant 0 : index
    %c0_54 = arith.constant 0 : index
    %91 = vector.load %arg10[%90, %c0_53, %c0_54] : memref<8x8x128xf32, #tpu.memory_space<vmem>>, vector<1x8x128xf32>
    %92 = vector.shape_cast %91 : vector<1x8x128xf32> to vector<8x128xf32>
    %93 = vector.shape_cast %89 : vector<8x128xf32> to vector<1x8x128xf32>
    tpu.vector_store %arg10[%90, %c0_53, %c0_54], %93 {strides = array<i32>} : memref<8x8x128xf32, #tpu.memory_space<vmem>>, vector<1x8x128xf32>,
    %c8_i32 = arith.constant 8 : i32
    %c0_55 = arith.constant 0 : index
    %c0_56 = arith.constant 0 : index
    %94 = vector.load %arg9[%c0_55, %c0_56] : memref<8x128xf32, #tpu.memory_space<vmem>>, vector<8x128xf32>
    tpu.vector_store %arg9[%c0_55, %c0_56], %89 {strides = array<i32>} : memref<8x128xf32, #tpu.memory_space<vmem>>, vector<8x128xf32>,
    %c0_57 = arith.constant 0 : index
    %c0_58 = arith.constant 0 : index
    %c0_59 = arith.constant 0 : index
    %95 = vector.load %arg10[%c0_57, %c0_58, %c0_59] : memref<8x8x128xf32, #tpu.memory_space<vmem>>, vector<8x8x128xf32>
    %96 = vector.shape_cast %95 : vector<8x8x128xf32> to vector<64x128xf32>
    %97 = arith.truncf %96 : vector<64x128xf32> to vector<64x128xbf16>
    %c0_60 = arith.constant 0 : index
    %c0_61 = arith.constant 0 : index
    %98 = vector.load %arg6[%c0_60, %c0_61] : memref<128x128xbf16, #tpu.memory_space<vmem>>, vector<128x128xbf16>
    %cst_62 = arith.constant dense<0.000000e+00> : vector<64x128xf32>
    %99 = tpu.matmul %97, %98, %cst_62 {dimension_numbers = #tpu.dot_dimension_numbers<[1], [0], [0], [1], [0, 0, 1, 1], [], []>} : vector<64x128xbf16>, vector<128x128xbf16>, vector<64x128xf32> -> vector<64x128xf32>
    %c0_63 = arith.constant 0 : index
    %c0_64 = arith.constant 0 : index
    %100 = vector.load %arg7[%c0_63, %c0_64] : memref<1x128xf32, #tpu.memory_space<vmem>>, vector<1x128xf32>
    %101 = vector.broadcast %100 : vector<1x128xf32> to vector<64x128xf32>
    %102 = arith.addf %99, %101 : vector<64x128xf32>
    %103 = math.tanh %102 : vector<64x128xf32>
    %104 = vector.shape_cast %103 : vector<64x128xf32> to vector<8x8x128xf32>
    %c0_65 = arith.constant 0 : index
    %c0_66 = arith.constant 0 : index
    %c0_67 = arith.constant 0 : index
    %105 = vector.load %arg8[%c0_65, %c0_66, %c0_67] : memref<8x8x128xf32, #tpu.memory_space<vmem>>, vector<8x8x128xf32>
    tpu.vector_store %arg8[%c0_65, %c0_66, %c0_67], %104 {strides = array<i32>} : memref<8x8x128xf32, #tpu.memory_space<vmem>>, vector<8x8x128xf32>,
    return
  }
  func.func @transform_0(%arg0: i32, %arg1: i32) -> (i32, i32, i32) {
    %c0_i32 = arith.constant 0 : i32
    %c0_i32_0 = arith.constant 0 : i32
    return %arg1, %arg0, %c0_i32 : i32, i32, i32
  }
  func.func @transform_1(%arg0: i32, %arg1: i32) -> (i32, i32) {
    %c0_i32 = arith.constant 0 : i32
    %c0_i32_0 = arith.constant 0 : i32
    %c0_i32_1 = arith.constant 0 : i32
    return %c0_i32, %c0_i32_0 : i32, i32
  }
  func.func @transform_2(%arg0: i32, %arg1: i32) -> (i32, i32) {
    %c0_i32 = arith.constant 0 : i32
    %c0_i32_0 = arith.constant 0 : i32
    %c0_i32_1 = arith.constant 0 : i32
    return %c0_i32, %c0_i32_0 : i32, i32
  }
  func.func @transform_3(%arg0: i32, %arg1: i32) -> (i32, i32) {
    %c0_i32 = arith.constant 0 : i32
    %c0_i32_0 = arith.constant 0 : i32
    %c0_i32_1 = arith.constant 0 : i32
    return %c0_i32, %c0_i32_0 : i32, i32
  }
  func.func @transform_4(%arg0: i32, %arg1: i32) -> (i32, i32) {
    %c0_i32 = arith.constant 0 : i32
    %c0_i32_0 = arith.constant 0 : i32
    %c0_i32_1 = arith.constant 0 : i32
    return %c0_i32, %c0_i32_0 : i32, i32
  }
  func.func @transform_5(%arg0: i32, %arg1: i32) -> (i32, i32) {
    %c0_i32 = arith.constant 0 : i32
    %c0_i32_0 = arith.constant 0 : i32
    %c0_i32_1 = arith.constant 0 : i32
    return %c0_i32, %c0_i32_0 : i32, i32
  }
  func.func @transform_6(%arg0: i32, %arg1: i32) -> (i32, i32, i32) {
    %c0_i32 = arith.constant 0 : i32
    %c0_i32_0 = arith.constant 0 : i32
    return %arg1, %arg0, %c0_i32 : i32, i32, i32
  }
}

</mosaic_0001>

<llo_original>
// kernel: tpu_custom_call.1
$region0: #{tpu_custom_call.1}
  #allocation0 [shape = 'u32[]', space=smem, size = 0x4, offset = 0x4, fixed_abs, tag = 'smem constant byte address 0x4 - core index']
  #allocation1 [shape = 'u32[144,128]{1,0:T(1,128)}', space=vmem, size = 0x12000, scoped, tag = 'internal scratch']
  #allocation2 [shape = 'f32[8,128]{1,0:T(8,128)}', space=vmem, size = 0x1000, scoped, tag = 'scratch operand']
  #allocation3 [shape = 'f32[8,8,128]{2,1,0:T(8,128)}', space=vmem, size = 0x8000, scoped, tag = 'scratch operand']
  %s0 = inlined_call_operand.hbm [shape: bf16[8,8,16], index: 0, kind: input, shape index: {}]
  %s1 = inlined_call_operand.hbm [shape: bf16[16,128], index: 1, kind: input, shape index: {}]
  %s2 = inlined_call_operand.vmem [shape: f32[1,128], index: 2, kind: input, shape index: {}]
  %s3 = inlined_call_operand.hbm [shape: bf16[128,128], index: 3, kind: input, shape index: {}]
  %s4 = inlined_call_operand.hbm [shape: bf16[128,128], index: 4, kind: input, shape index: {}]
  %s5 = inlined_call_operand.vmem [shape: f32[1,128], index: 5, kind: input, shape index: {}]
  %s6 = inlined_call_operand.hbm [shape: f32[8,8,128], index: 6, kind: output, shape index: {}]
  %s7 = sld [smem:[#allocation0]]
  $region54: #{tpu_custom_call.1} parent=0
    _
  %s9 = ssub.s32 1, %s7
  %s10 = scalar_select 0, %s9, %s7
  $region1: #{tpu_custom_call.1} parent=0
    #allocation4 [shape = 'u8[16384]{0}', space=vmem, size = 0x4000, scoped, tag = 'input window, operand 0, single buffered']
    #allocation5 [shape = 's32[1]{0}', space=sflag, size = 0x4, scoped, tag = 'scoped memory for tpu_custom_call.1']
    #allocation6 [shape = 's32[1]{0}', space=sflag, size = 0x4, scoped, tag = 'scoped memory for tpu_custom_call.1']
    #allocation7 [shape = 'u8[4096]{0}', space=vmem, size = 0x1000, scoped, tag = 'input window, operand 1, single buffered']
    #allocation8 [shape = 's32[1]{0}', space=sflag, size = 0x4, scoped, tag = 'scoped memory for tpu_custom_call.1']
    #allocation9 [shape = 'u8[32768]{0}', space=vmem, size = 0x8000, scoped, tag = 'input window, operand 3, single buffered']
    #allocation10 [shape = 'u8[32768]{0}', space=vmem, size = 0x8000, scoped, tag = 'input window, operand 4, single buffered']
    #allocation11 [shape = 's32[1]{0}', space=sflag, size = 0x4, scoped, tag = 'scoped memory for tpu_custom_call.1']
    #allocation12 [shape = 'u8[32768]{0}', space=vmem, size = 0x8000, scoped, tag = 'output window, operand 0, single buffered']
    %11 = vsyncpa [#allocation5], 0
    %12 = vsyncpa [#allocation8], 0
    %13 = vsyncpa [#allocation11], 0
    %14 = vsyncpa [#allocation6], 0
    // Predicated region
    $region2: #{tpu_custom_call.1} parent=1 // pred_check
      _
    $region3: #{tpu_custom_call.1} parent=1 // pred_check_branch
      %16 = sbr.rel (0) target = $region5
    $region4: #{tpu_custom_call.1} parent=1 // pred_region
      %s18 = ssub.s32 512, 512
      %19 = vsyncadd [#allocation5], %s18
      %s20 = sshll.u32 [#allocation4], 4
      %s21 = int_to_ptr.vmem [resolvable:$true] %s20
      %26 = dma.hbm_to_vmem [thread:$0]  %s0, 512, %s21, [#allocation5], 64, 64, 4
    $region5: #{tpu_custom_call.1} parent=1 // pred_fallthru
      _
    // Predicated region
    $region6: #{tpu_custom_call.1} parent=1 // pred_check
      _
    $region7: #{tpu_custom_call.1} parent=1 // pred_check_branch
      %28 = sbr.rel (0) target = $region9
    $region8: #{tpu_custom_call.1} parent=1 // pred_region
      %s30 = ssub.s32 128, 128
      %31 = vsyncadd [#allocation8], %s30
      %s32 = sshll.u32 [#allocation7], 4
      %s33 = int_to_ptr.vmem [resolvable:$true] %s32
      %38 = dma.hbm_to_vmem [thread:$0]  %s1, 128, %s33, [#allocation8], 64, 64, 4
    $region9: #{tpu_custom_call.1} parent=1 // pred_fallthru
      _
    // Predicated region
    $region10: #{tpu_custom_call.1} parent=1 // pred_check
      _
    $region11: #{tpu_custom_call.1} parent=1 // pred_check_branch
      %40 = sbr.rel (0) target = $region13
    $region12: #{tpu_custom_call.1} parent=1 // pred_region
      _
    $region13: #{tpu_custom_call.1} parent=1 // pred_fallthru
      _
    // Predicated region
    $region14: #{tpu_custom_call.1} parent=1 // pred_check
      _
    $region15: #{tpu_custom_call.1} parent=1 // pred_check_branch
      %42 = sbr.rel (0) target = $region17
    $region16: #{tpu_custom_call.1} parent=1 // pred_region
      %s44 = ssub.s32 1024, 1024
      %45 = vsyncadd [#allocation8], %s44
      %s46 = sshll.u32 [#allocation9], 4
      %s47 = int_to_ptr.vmem [resolvable:$true] %s46
      %52 = dma.hbm_to_vmem [thread:$0]  %s3, 1024, %s47, [#allocation8], 64, 64, 4
    $region17: #{tpu_custom_call.1} parent=1 // pred_fallthru
      _
    // Predicated region
    $region18: #{tpu_custom_call.1} parent=1 // pred_check
      _
    $region19: #{tpu_custom_call.1} parent=1 // pred_check_branch
      %54 = sbr.rel (0) target = $region21
    $region20: #{tpu_custom_call.1} parent=1 // pred_region
      %s56 = ssub.s32 1024, 1024
      %57 = vsyncadd [#allocation11], %s56
      %s58 = sshll.u32 [#allocation10], 4
      %s59 = int_to_ptr.vmem [resolvable:$true] %s58
      %64 = dma.hbm_to_vmem [thread:$0]  %s4, 1024, %s59, [#allocation11], 64, 64, 4
    $region21: #{tpu_custom_call.1} parent=1 // pred_fallthru
      _
    // Predicated region
    $region22: #{tpu_custom_call.1} parent=1 // pred_check
      _
    $region23: #{tpu_custom_call.1} parent=1 // pred_check_branch
      %66 = sbr.rel (0) target = $region25
    $region24: #{tpu_custom_call.1} parent=1 // pred_region
      _
    $region25: #{tpu_custom_call.1} parent=1 // pred_fallthru
      _
    // Predicated region
    $region26: #{tpu_custom_call.1} parent=1 // pred_check
      _
    $region27: #{tpu_custom_call.1} parent=1 // pred_check_branch
      %68 = sbr.rel (0) target = $region29
    $region28: #{tpu_custom_call.1} parent=1 // pred_region
      %69 = dma.done [#allocation5], 512
    $region29: #{tpu_custom_call.1} parent=1 // pred_fallthru
      _
    // Predicated region
    $region30: #{tpu_custom_call.1} parent=1 // pred_check
      _
    $region31: #{tpu_custom_call.1} parent=1 // pred_check_branch
      %71 = sbr.rel (0) target = $region33
    $region32: #{tpu_custom_call.1} parent=1 // pred_region
      %72 = dma.done [#allocation8], 128
    $region33: #{tpu_custom_call.1} parent=1 // pred_fallthru
      _
    // Predicated region
    $region34: #{tpu_custom_call.1} parent=1 // pred_check
      _
    $region35: #{tpu_custom_call.1} parent=1 // pred_check_branch
      %74 = sbr.rel (0) target = $region37
    $region36: #{tpu_custom_call.1} parent=1 // pred_region
      %75 = dma.done [#allocation8], 1024
    $region37: #{tpu_custom_call.1} parent=1 // pred_fallthru
      _
    // Predicated region
    $region38: #{tpu_custom_call.1} parent=1 // pred_check
      _
    $region39: #{tpu_custom_call.1} parent=1 // pred_check_branch
      %77 = sbr.rel (0) target = $region41
    $region40: #{tpu_custom_call.1} parent=1 // pred_region
      %78 = dma.done [#allocation11], 1024
    $region41: #{tpu_custom_call.1} parent=1 // pred_fallthru
      _
    %p80 = scmp.eq.s32.totalorder 0, 0
    // Predicated region
    $region42: #{tpu_custom_call.1} parent=1 // pred_check
      %p81 = pneg %p80
    $region43: #{tpu_custom_call.1} parent=1 // pred_check_branch
      %83 = sbr.rel (%p81) target = $region45
    $region44: #{tpu_custom_call.1} parent=1 // pred_region
      %84 = vst [vmem:[#allocation2] sm:$0xff] 0.0
    $region45: #{tpu_custom_call.1} parent=1 // pred_fallthru
      _
    %v85 = vld [vmem:[#allocation4] sm:$0xf]
    %v86 = vld [vmem:[#allocation4 + $0x4] sm:$0xf]
    %v87 = vld [vmem:[#allocation4 + $0x8] sm:$0xf]
    %v88 = vld [vmem:[#allocation4 + $0xc] sm:$0xf]
    %v89 = vld [vmem:[#allocation4 + $0x10] sm:$0xf]
    %v90 = vld [vmem:[#allocation4 + $0x14] sm:$0xf]
    %v91 = vld [vmem:[#allocation4 + $0x18] sm:$0xf]
    %v92 = vld [vmem:[#allocation4 + $0x1c] sm:$0xf]
    %v93 = vld [vmem:[#allocation7] sm:$0xf]
    %v94 = vld [vmem:[#allocation7 + $0x4] sm:$0xf]
    %v95 = vld [vmem:[%s2] sm:$0x1]
    %v97 = vlaneseq
    %v98 = vshrl.u32 %v97, 7
    %v99 = vsub.s32 0, %v98
    %v100 = vrot.slane %v95, %v99
    %v110 = vunpack.c.l.b16 %v85
    %v111 = vunpack.c.l.b16 %v86
    %v112 = vunpack.c.l.b16 %v87
    %v113 = vunpack.c.l.b16 %v88
    %v114 = vunpack.c.l.b16 %v89
    %v115 = vunpack.c.l.b16 %v90
    %v116 = vunpack.c.l.b16 %v91
    %v117 = vunpack.c.l.b16 %v92
    %v118 = vpack.c.b16 %v111, %v110
    %v119 = vpack.c.b16 %v113, %v112
    %v120 = vpack.c.b16 %v115, %v114
    %v121 = vpack.c.b16 %v117, %v116
    %v124 = vunpack.c.l.b16 %v93
    %v125 = vunpack.c.l.b16 %v94
    %v126 = vpack.c.b16 %v125, %v124
    %vm128 = vcmask 130048
    %v130 = vsel %vm128, %v118, 0
    %v133 = vsel %vm128, %v119, 0
    %v136 = vsel %vm128, %v120, 0
    %v139 = vsel %vm128, %v121, 0
    %141 = vmatprep.subr.bf16.mxu0 0
    %142 = vmatpush1.bf16.msra.mxu0 0
    %143 = vmatprep.subr.bf16.mxu0 0
    %144 = vmatpush1.bf16.msra.mxu0 0
    %145 = vmatprep.subr.bf16.mxu0 0
    %146 = vmatpush1.bf16.msra.mxu0 0
    %147 = vmatprep.subr.bf16.mxu0 0
    %148 = vmatpush1.bf16.msra.mxu0 0
    %149 = vmatprep.subr.bf16.mxu0 0
    %150 = vmatpush1.bf16.msra.mxu0 0
    %151 = vmatprep.subr.bf16.mxu0 0
    %152 = vmatpush1.bf16.msra.mxu0 0
    %153 = vmatprep.subr.bf16.mxu0 0
    %154 = vmatpush1.bf16.msra.mxu0 0
    %155 = vmatprep.subr.bf16.mxu0 0
    %156 = vmatpush1.bf16.msra.mxu0 %v126
    %157 = vmatprep.subr.bf16.mxu0 0
    %158 = vmatpush2.bf16.msra.mxu0 0
    %159 = vmatprep.subr.bf16.mxu0 0
    %160 = vmatpush2.bf16.msra.mxu0 0
    %161 = vmatprep.subr.bf16.mxu0 0
    %162 = vmatpush2.bf16.msra.mxu0 0
    %163 = vmatprep.subr.bf16.mxu0 0
    %164 = vmatpush2.bf16.msra.mxu0 0
    %165 = vmatprep.subr.bf16.mxu0 0
    %166 = vmatpush2.bf16.msra.mxu0 0
    %167 = vmatprep.subr.bf16.mxu0 0
    %168 = vmatpush2.bf16.msra.mxu0 0
    %169 = vmatprep.subr.bf16.mxu0 0
    %170 = vmatpush2.bf16.msra.mxu0 0
    %171 = vmatprep.subr.bf16.mxu0 0
    %172 = vmatpush2.bf16.msra.mxu0 0
    %173 = vmatprep.mubr.bf16.mxu0 0
    %174 = vmatmul.mubr.bf16.gmra.mxu0 %v130
    %v175 = vpop.f32.mrf.mxu0
    %v176 = vadd.f32 %v100, %v175
    %v177 = vpop.f32.mrf.mxu0
    %v178 = vpop.f32.mrf.mxu0
    %v179 = vadd.f32 %v100, %v178
    %v180 = vpop.f32.mrf.mxu0
    %181 = vmatprep.mubr.bf16.mxu0 0
    %182 = vmatmul.mubr.bf16.gmra.mxu0 %v133
    %v183 = vpop.f32.mrf.mxu0
    %v184 = vadd.f32 %v100, %v183
    %v185 = vpop.f32.mrf.mxu0
    %v186 = vpop.f32.mrf.mxu0
    %v187 = vadd.f32 %v100, %v186
    %v188 = vpop.f32.mrf.mxu0
    %189 = vmatprep.mubr.bf16.mxu0 0
    %190 = vmatmul.mubr.bf16.gmra.mxu0 %v136
    %v191 = vpop.f32.mrf.mxu0
    %v192 = vadd.f32 %v100, %v191
    %v193 = vpop.f32.mrf.mxu0
    %v194 = vpop.f32.mrf.mxu0
    %v195 = vadd.f32 %v100, %v194
    %v196 = vpop.f32.mrf.mxu0
    %197 = vmatprep.mubr.bf16.mxu0 0
    %198 = vmatmul.mubr.bf16.gmra.mxu0 %v139
    %v199 = vpop.f32.mrf.mxu0
    %v200 = vadd.f32 %v100, %v199
    %v201 = vpop.f32.mrf.mxu0
    %v202 = vpop.f32.mrf.mxu0
    %v203 = vadd.f32 %v100, %v202
    %v204 = vpop.f32.mrf.mxu0
    %205 = vdwg.mxu0
    %206 = vst [vmem:[#allocation3] sm:$0xff] %v176
    %207 = vst [vmem:[#allocation3 + $0x8] sm:$0xff] %v179
    %208 = vst [vmem:[#allocation3 + $0x10] sm:$0xff] %v184
    %209 = vst [vmem:[#allocation3 + $0x18] sm:$0xff] %v187
    %210 = vst [vmem:[#allocation3 + $0x20] sm:$0xff] %v192
    %211 = vst [vmem:[#allocation3 + $0x28] sm:$0xff] %v195
    %212 = vst [vmem:[#allocation3 + $0x30] sm:$0xff] %v200
    %213 = vst [vmem:[#allocation3 + $0x38] sm:$0xff] %v203
    %v214 = vld [vmem:[#allocation9] sm:$0xf]
    %v215 = vld [vmem:[#allocation9 + $0x4] sm:$0xf]
    %v216 = vld [vmem:[#allocation9 + $0x8] sm:$0xf]
    %v217 = vld [vmem:[#allocation9 + $0xc] sm:$0xf]
    %v218 = vld [vmem:[#allocation9 + $0x10] sm:$0xf]
    %v219 = vld [vmem:[#allocation9 + $0x14] sm:$0xf]
    %v220 = vld [vmem:[#allocation9 + $0x18] sm:$0xf]
    %v221 = vld [vmem:[#allocation9 + $0x1c] sm:$0xf]
    %v222 = vld [vmem:[#allocation9 + $0x20] sm:$0xf]
    %v223 = vld [vmem:[#allocation9 + $0x24] sm:$0xf]
    %v224 = vld [vmem:[#allocation9 + $0x28] sm:$0xf]
    %v225 = vld [vmem:[#allocation9 + $0x2c] sm:$0xf]
    %v226 = vld [vmem:[#allocation9 + $0x30] sm:$0xf]
    %v227 = vld [vmem:[#allocation9 + $0x34] sm:$0xf]
    %v228 = vld [vmem:[#allocation9 + $0x38] sm:$0xf]
    %v229 = vld [vmem:[#allocation9 + $0x3c] sm:$0xf]
    %v230 = vld [vmem:[#allocation2] sm:$0xff]
    %v231 = vld [vmem:[#allocation3] sm:$0xff]
    %v232 = vpack.c.bf16 %v230, %v230
    %v249 = vunpack.c.l.b16 %v214
    %v250 = vunpack.c.l.b16 %v215
    %v251 = vunpack.c.l.b16 %v216
    %v252 = vunpack.c.l.b16 %v217
    %v253 = vunpack.c.l.b16 %v218
    %v254 = vunpack.c.l.b16 %v219
    %v255 = vunpack.c.l.b16 %v220
    %v256 = vunpack.c.l.b16 %v221
    %v257 = vunpack.c.l.b16 %v222
    %v258 = vunpack.c.l.b16 %v223
    %v259 = vunpack.c.l.b16 %v224
    %v260 = vunpack.c.l.b16 %v225
    %v261 = vunpack.c.l.b16 %v226
    %v262 = vunpack.c.l.b16 %v227
    %v263 = vunpack.c.l.b16 %v228
    %v264 = vunpack.c.l.b16 %v229
    %v265 = vpack.c.b16 %v250, %v249
    %v266 = vpack.c.b16 %v252, %v251
    %v267 = vpack.c.b16 %v254, %v253
    %v268 = vpack.c.b16 %v256, %v255
    %v269 = vpack.c.b16 %v258, %v257
    %v270 = vpack.c.b16 %v260, %v259
    %v271 = vpack.c.b16 %v262, %v261
    %v272 = vpack.c.b16 %v264, %v263
    %281 = vmatprep.subr.bf16.mxu0 0
    %282 = vmatpush1.bf16.msra.mxu0 %v272
    %283 = vmatprep.subr.bf16.mxu0 0
    %284 = vmatpush1.bf16.msra.mxu0 %v271
    %285 = vmatprep.subr.bf16.mxu0 0
    %286 = vmatpush1.bf16.msra.mxu0 %v270
    %287 = vmatprep.subr.bf16.mxu0 0
    %288 = vmatpush1.bf16.msra.mxu0 %v269
    %289 = vmatprep.subr.bf16.mxu0 0
    %290 = vmatpush1.bf16.msra.mxu0 %v268
    %291 = vmatprep.subr.bf16.mxu0 0
    %292 = vmatpush1.bf16.msra.mxu0 %v267
    %293 = vmatprep.subr.bf16.mxu0 0
    %294 = vmatpush1.bf16.msra.mxu0 %v266
    %295 = vmatprep.subr.bf16.mxu0 0
    %296 = vmatpush1.bf16.msra.mxu0 %v265
    %297 = vmatprep.subr.bf16.mxu0 0
    %298 = vmatpush2.bf16.msra.mxu0 0
    %299 = vmatprep.subr.bf16.mxu0 0
    %300 = vmatpush2.bf16.msra.mxu0 0
    %301 = vmatprep.subr.bf16.mxu0 0
    %302 = vmatpush2.bf16.msra.mxu0 0
    %303 = vmatprep.subr.bf16.mxu0 0
    %304 = vmatpush2.bf16.msra.mxu0 0
    %305 = vmatprep.subr.bf16.mxu0 0
    %306 = vmatpush2.bf16.msra.mxu0 0
    %307 = vmatprep.subr.bf16.mxu0 0
    %308 = vmatpush2.bf16.msra.mxu0 0
    %309 = vmatprep.subr.bf16.mxu0 0
    %310 = vmatpush2.bf16.msra.mxu0 0
    %311 = vmatprep.subr.bf16.mxu0 0
    %312 = vmatpush2.bf16.msra.mxu0 0
    %313 = vmatprep.mubr.bf16.mxu0 0
    %314 = vmatmul.mubr.bf16.gmra.mxu0 %v232
    %v315 = vpop.f32.mrf.mxu0
    %v316 = vadd.f32 0.0, %v315
    %v317 = vpop.f32.mrf.mxu0
    %v318 = vpop.f32.mrf.mxu0
    %v319 = vpop.f32.mrf.mxu0
    %320 = vdwg.mxu0
    %v321 = vadd.f32 %v231, %v316
    %322 = vst [vmem:[#allocation3] sm:$0xff] %v321
    %s323 = scalar_lea.vmem [#allocation3], 8
    %v324 = vld [vmem:[%s323] sm:$0xff]
    %v325 = vpack.c.bf16 %v321, %v321
    %326 = vmatprep.subr.bf16.mxu0 0
    %327 = vmatpush1.bf16.msra.mxu0 %v272
    %328 = vmatprep.subr.bf16.mxu0 0
    %329 = vmatpush1.bf16.msra.mxu0 %v271
    %330 = vmatprep.subr.bf16.mxu0 0
    %331 = vmatpush1.bf16.msra.mxu0 %v270
    %332 = vmatprep.subr.bf16.mxu0 0
    %333 = vmatpush1.bf16.msra.mxu0 %v269
    %334 = vmatprep.subr.bf16.mxu0 0
    %335 = vmatpush1.bf16.msra.mxu0 %v268
    %336 = vmatprep.subr.bf16.mxu0 0
    %337 = vmatpush1.bf16.msra.mxu0 %v267
    %338 = vmatprep.subr.bf16.mxu0 0
    %339 = vmatpush1.bf16.msra.mxu0 %v266
    %340 = vmatprep.subr.bf16.mxu0 0
    %341 = vmatpush1.bf16.msra.mxu0 %v265
    %342 = vmatprep.subr.bf16.mxu0 0
    %343 = vmatpush2.bf16.msra.mxu0 0
    %344 = vmatprep.subr.bf16.mxu0 0
    %345 = vmatpush2.bf16.msra.mxu0 0
    %346 = vmatprep.subr.bf16.mxu0 0
    %347 = vmatpush2.bf16.msra.mxu0 0
    %348 = vmatprep.subr.bf16.mxu0 0
    %349 = vmatpush2.bf16.msra.mxu0 0
    %350 = vmatprep.subr.bf16.mxu0 0
    %351 = vmatpush2.bf16.msra.mxu0 0
    %352 = vmatprep.subr.bf16.mxu0 0
    %353 = vmatpush2.bf16.msra.mxu0 0
    %354 = vmatprep.subr.bf16.mxu0 0
    %355 = vmatpush2.bf16.msra.mxu0 0
    %356 = vmatprep.subr.bf16.mxu0 0
    %357 = vmatpush2.bf16.msra.mxu0 0
    %358 = vmatprep.mubr.bf16.mxu0 0
    %359 = vmatmul.mubr.bf16.gmra.mxu0 %v325
    %v360 = vpop.f32.mrf.mxu0
    %v361 = vadd.f32 0.0, %v360
    %v362 = vpop.f32.mrf.mxu0
    %v363 = vpop.f32.mrf.mxu0
    %v364 = vpop.f32.mrf.mxu0
    %365 = vdwg.mxu0
    %v366 = vadd.f32 %v324, %v361
    %367 = vst [vmem:[%s323] sm:$0xff] %v366
    %s368 = scalar_lea.vmem [#allocation3], 16
    %v369 = vld [vmem:[%s368] sm:$0xff]
    %v370 = vpack.c.bf16 %v366, %v366
    %371 = vmatprep.subr.bf16.mxu0 0
    %372 = vmatpush1.bf16.msra.mxu0 %v272
    %373 = vmatprep.subr.bf16.mxu0 0
    %374 = vmatpush1.bf16.msra.mxu0 %v271
    %375 = vmatprep.subr.bf16.mxu0 0
    %376 = vmatpush1.bf16.msra.mxu0 %v270
    %377 = vmatprep.subr.bf16.mxu0 0
    %378 = vmatpush1.bf16.msra.mxu0 %v269
    %379 = vmatprep.subr.bf16.mxu0 0
    %380 = vmatpush1.bf16.msra.mxu0 %v268
    %381 = vmatprep.subr.bf16.mxu0 0
    %382 = vmatpush1.bf16.msra.mxu0 %v267
    %383 = vmatprep.subr.bf16.mxu0 0
    %384 = vmatpush1.bf16.msra.mxu0 %v266
    %385 = vmatprep.subr.bf16.mxu0 0
    %386 = vmatpush1.bf16.msra.mxu0 %v265
    %387 = vmatprep.subr.bf16.mxu0 0
    %388 = vmatpush2.bf16.msra.mxu0 0
    %389 = vmatprep.subr.bf16.mxu0 0
    %390 = vmatpush2.bf16.msra.mxu0 0
    %391 = vmatprep.subr.bf16.mxu0 0
    %392 = vmatpush2.bf16.msra.mxu0 0
    %393 = vmatprep.subr.bf16.mxu0 0
    %394 = vmatpush2.bf16.msra.mxu0 0
    %395 = vmatprep.subr.bf16.mxu0 0
    %396 = vmatpush2.bf16.msra.mxu0 0
    %397 = vmatprep.subr.bf16.mxu0 0
    %398 = vmatpush2.bf16.msra.mxu0 0
    %399 = vmatprep.subr.bf16.mxu0 0
    %400 = vmatpush2.bf16.msra.mxu0 0
    %401 = vmatprep.subr.bf16.mxu0 0
    %402 = vmatpush2.bf16.msra.mxu0 0
    %403 = vmatprep.mubr.bf16.mxu0 0
    %404 = vmatmul.mubr.bf16.gmra.mxu0 %v370
    %v405 = vpop.f32.mrf.mxu0
    %v406 = vadd.f32 0.0, %v405
    %v407 = vpop.f32.mrf.mxu0
    %v408 = vpop.f32.mrf.mxu0
    %v409 = vpop.f32.mrf.mxu0
    %410 = vdwg.mxu0
    %v411 = vadd.f32 %v369, %v406
    %412 = vst [vmem:[%s368] sm:$0xff] %v411
    %s413 = scalar_lea.vmem [#allocation3], 24
    %v414 = vld [vmem:[%s413] sm:$0xff]
    %v415 = vpack.c.bf16 %v411, %v411
    %416 = vmatprep.subr.bf16.mxu0 0
    %417 = vmatpush1.bf16.msra.mxu0 %v272
    %418 = vmatprep.subr.bf16.mxu0 0
    %419 = vmatpush1.bf16.msra.mxu0 %v271
    %420 = vmatprep.subr.bf16.mxu0 0
    %421 = vmatpush1.bf16.msra.mxu0 %v270
    %422 = vmatprep.subr.bf16.mxu0 0
    %423 = vmatpush1.bf16.msra.mxu0 %v269
    %424 = vmatprep.subr.bf16.mxu0 0
    %425 = vmatpush1.bf16.msra.mxu0 %v268
    %426 = vmatprep.subr.bf16.mxu0 0
    %427 = vmatpush1.bf16.msra.mxu0 %v267
    %428 = vmatprep.subr.bf16.mxu0 0
    %429 = vmatpush1.bf16.msra.mxu0 %v266
    %430 = vmatprep.subr.bf16.mxu0 0
    %431 = vmatpush1.bf16.msra.mxu0 %v265
    %432 = vmatprep.subr.bf16.mxu0 0
    %433 = vmatpush2.bf16.msra.mxu0 0
    %434 = vmatprep.subr.bf16.mxu0 0
    %435 = vmatpush2.bf16.msra.mxu0 0
    %436 = vmatprep.subr.bf16.mxu0 0
    %437 = vmatpush2.bf16.msra.mxu0 0
    %438 = vmatprep.subr.bf16.mxu0 0
    %439 = vmatpush2.bf16.msra.mxu0 0
    %440 = vmatprep.subr.bf16.mxu0 0
    %441 = vmatpush2.bf16.msra.mxu0 0
    %442 = vmatprep.subr.bf16.mxu0 0
    %443 = vmatpush2.bf16.msra.mxu0 0
    %444 = vmatprep.subr.bf16.mxu0 0
    %445 = vmatpush2.bf16.msra.mxu0 0
    %446 = vmatprep.subr.bf16.mxu0 0
    %447 = vmatpush2.bf16.msra.mxu0 0
    %448 = vmatprep.mubr.bf16.mxu0 0
    %449 = vmatmul.mubr.bf16.gmra.mxu0 %v415
    %v450 = vpop.f32.mrf.mxu0
    %v451 = vadd.f32 0.0, %v450
    %v452 = vpop.f32.mrf.mxu0
    %v453 = vpop.f32.mrf.mxu0
    %v454 = vpop.f32.mrf.mxu0
    %455 = vdwg.mxu0
    %v456 = vadd.f32 %v414, %v451
    %457 = vst [vmem:[%s413] sm:$0xff] %v456
    %s458 = scalar_lea.vmem [#allocation3], 32
    %v459 = vld [vmem:[%s458] sm:$0xff]
    %v460 = vpack.c.bf16 %v456, %v456
    %461 = vmatprep.subr.bf16.mxu0 0
    %462 = vmatpush1.bf16.msra.mxu0 %v272
    %463 = vmatprep.subr.bf16.mxu0 0
    %464 = vmatpush1.bf16.msra.mxu0 %v271
    %465 = vmatprep.subr.bf16.mxu0 0
    %466 = vmatpush1.bf16.msra.mxu0 %v270
    %467 = vmatprep.subr.bf16.mxu0 0
    %468 = vmatpush1.bf16.msra.mxu0 %v269
    %469 = vmatprep.subr.bf16.mxu0 0
    %470 = vmatpush1.bf16.msra.mxu0 %v268
    %471 = vmatprep.subr.bf16.mxu0 0
    %472 = vmatpush1.bf16.msra.mxu0 %v267
    %473 = vmatprep.subr.bf16.mxu0 0
    %474 = vmatpush1.bf16.msra.mxu0 %v266
    %475 = vmatprep.subr.bf16.mxu0 0
    %476 = vmatpush1.bf16.msra.mxu0 %v265
    %477 = vmatprep.subr.bf16.mxu0 0
    %478 = vmatpush2.bf16.msra.mxu0 0
    %479 = vmatprep.subr.bf16.mxu0 0
    %480 = vmatpush2.bf16.msra.mxu0 0
    %481 = vmatprep.subr.bf16.mxu0 0
    %482 = vmatpush2.bf16.msra.mxu0 0
    %483 = vmatprep.subr.bf16.mxu0 0
    %484 = vmatpush2.bf16.msra.mxu0 0
    %485 = vmatprep.subr.bf16.mxu0 0
    %486 = vmatpush2.bf16.msra.mxu0 0
    %487 = vmatprep.subr.bf16.mxu0 0
    %488 = vmatpush2.bf16.msra.mxu0 0
    %489 = vmatprep.subr.bf16.mxu0 0
    %490 = vmatpush2.bf16.msra.mxu0 0
    %491 = vmatprep.subr.bf16.mxu0 0
    %492 = vmatpush2.bf16.msra.mxu0 0
    %493 = vmatprep.mubr.bf16.mxu0 0
    %494 = vmatmul.mubr.bf16.gmra.mxu0 %v460
    %v495 = vpop.f32.mrf.mxu0
    %v496 = vadd.f32 0.0, %v495
    %v497 = vpop.f32.mrf.mxu0
    %v498 = vpop.f32.mrf.mxu0
    %v499 = vpop.f32.mrf.mxu0
    %500 = vdwg.mxu0
    %v501 = vadd.f32 %v459, %v496
    %502 = vst [vmem:[%s458] sm:$0xff] %v501
    %s503 = scalar_lea.vmem [#allocation3], 40
    %v504 = vld [vmem:[%s503] sm:$0xff]
    %v505 = vpack.c.bf16 %v501, %v501
    %506 = vmatprep.subr.bf16.mxu0 0
    %507 = vmatpush1.bf16.msra.mxu0 %v272
    %508 = vmatprep.subr.bf16.mxu0 0
    %509 = vmatpush1.bf16.msra.mxu0 %v271
    %510 = vmatprep.subr.bf16.mxu0 0
    %511 = vmatpush1.bf16.msra.mxu0 %v270
    %512 = vmatprep.subr.bf16.mxu0 0
    %513 = vmatpush1.bf16.msra.mxu0 %v269
    %514 = vmatprep.subr.bf16.mxu0 0
    %515 = vmatpush1.bf16.msra.mxu0 %v268
    %516 = vmatprep.subr.bf16.mxu0 0
    %517 = vmatpush1.bf16.msra.mxu0 %v267
    %518 = vmatprep.subr.bf16.mxu0 0
    %519 = vmatpush1.bf16.msra.mxu0 %v266
    %520 = vmatprep.subr.bf16.mxu0 0
    %521 = vmatpush1.bf16.msra.mxu0 %v265
    %522 = vmatprep.subr.bf16.mxu0 0
    %523 = vmatpush2.bf16.msra.mxu0 0
    %524 = vmatprep.subr.bf16.mxu0 0
    %525 = vmatpush2.bf16.msra.mxu0 0
    %526 = vmatprep.subr.bf16.mxu0 0
    %527 = vmatpush2.bf16.msra.mxu0 0
    %528 = vmatprep.subr.bf16.mxu0 0
    %529 = vmatpush2.bf16.msra.mxu0 0
    %530 = vmatprep.subr.bf16.mxu0 0
    %531 = vmatpush2.bf16.msra.mxu0 0
    %532 = vmatprep.subr.bf16.mxu0 0
    %533 = vmatpush2.bf16.msra.mxu0 0
    %534 = vmatprep.subr.bf16.mxu0 0
    %535 = vmatpush2.bf16.msra.mxu0 0
    %536 = vmatprep.subr.bf16.mxu0 0
    %537 = vmatpush2.bf16.msra.mxu0 0
    %538 = vmatprep.mubr.bf16.mxu0 0
    %539 = vmatmul.mubr.bf16.gmra.mxu0 %v505
    %v540 = vpop.f32.mrf.mxu0
    %v541 = vadd.f32 0.0, %v540
    %v542 = vpop.f32.mrf.mxu0
    %v543 = vpop.f32.mrf.mxu0
    %v544 = vpop.f32.mrf.mxu0
    %545 = vdwg.mxu0
    %v546 = vadd.f32 %v504, %v541
    %547 = vst [vmem:[%s503] sm:$0xff] %v546
    %s548 = scalar_lea.vmem [#allocation3], 48
    %v549 = vld [vmem:[%s548] sm:$0xff]
    %v550 = vpack.c.bf16 %v546, %v546
    %551 = vmatprep.subr.bf16.mxu0 0
    %552 = vmatpush1.bf16.msra.mxu0 %v272
    %553 = vmatprep.subr.bf16.mxu0 0
    %554 = vmatpush1.bf16.msra.mxu0 %v271
    %555 = vmatprep.subr.bf16.mxu0 0
    %556 = vmatpush1.bf16.msra.mxu0 %v270
    %557 = vmatprep.subr.bf16.mxu0 0
    %558 = vmatpush1.bf16.msra.mxu0 %v269
    %559 = vmatprep.subr.bf16.mxu0 0
    %560 = vmatpush1.bf16.msra.mxu0 %v268
    %561 = vmatprep.subr.bf16.mxu0 0
    %562 = vmatpush1.bf16.msra.mxu0 %v267
    %563 = vmatprep.subr.bf16.mxu0 0
    %564 = vmatpush1.bf16.msra.mxu0 %v266
    %565 = vmatprep.subr.bf16.mxu0 0
    %566 = vmatpush1.bf16.msra.mxu0 %v265
    %567 = vmatprep.subr.bf16.mxu0 0
    %568 = vmatpush2.bf16.msra.mxu0 0
    %569 = vmatprep.subr.bf16.mxu0 0
    %570 = vmatpush2.bf16.msra.mxu0 0
    %571 = vmatprep.subr.bf16.mxu0 0
    %572 = vmatpush2.bf16.msra.mxu0 0
    %573 = vmatprep.subr.bf16.mxu0 0
    %574 = vmatpush2.bf16.msra.mxu0 0
    %575 = vmatprep.subr.bf16.mxu0 0
    %576 = vmatpush2.bf16.msra.mxu0 0
    %577 = vmatprep.subr.bf16.mxu0 0
    %578 = vmatpush2.bf16.msra.mxu0 0
    %579 = vmatprep.subr.bf16.mxu0 0
    %580 = vmatpush2.bf16.msra.mxu0 0
    %581 = vmatprep.subr.bf16.mxu0 0
    %582 = vmatpush2.bf16.msra.mxu0 0
    %583 = vmatprep.mubr.bf16.mxu0 0
    %584 = vmatmul.mubr.bf16.gmra.mxu0 %v550
    %v585 = vpop.f32.mrf.mxu0
    %v586 = vadd.f32 0.0, %v585
    %v587 = vpop.f32.mrf.mxu0
    %v588 = vpop.f32.mrf.mxu0
    %v589 = vpop.f32.mrf.mxu0
    %590 = vdwg.mxu0
    %v591 = vadd.f32 %v549, %v586
    %592 = vst [vmem:[%s548] sm:$0xff] %v591
    %s593 = scalar_lea.vmem [#allocation3], 56
    %v594 = vld [vmem:[%s593] sm:$0xff]
    %v595 = vpack.c.bf16 %v591, %v591
    %596 = vmatprep.subr.bf16.mxu0 0
    %597 = vmatpush1.bf16.msra.mxu0 %v272
    %598 = vmatprep.subr.bf16.mxu0 0
    %599 = vmatpush1.bf16.msra.mxu0 %v271
    %600 = vmatprep.subr.bf16.mxu0 0
    %601 = vmatpush1.bf16.msra.mxu0 %v270
    %602 = vmatprep.subr.bf16.mxu0 0
    %603 = vmatpush1.bf16.msra.mxu0 %v269
    %604 = vmatprep.subr.bf16.mxu0 0
    %605 = vmatpush1.bf16.msra.mxu0 %v268
    %606 = vmatprep.subr.bf16.mxu0 0
    %607 = vmatpush1.bf16.msra.mxu0 %v267
    %608 = vmatprep.subr.bf16.mxu0 0
    %609 = vmatpush1.bf16.msra.mxu0 %v266
    %610 = vmatprep.subr.bf16.mxu0 0
    %611 = vmatpush1.bf16.msra.mxu0 %v265
    %612 = vmatprep.subr.bf16.mxu0 0
    %613 = vmatpush2.bf16.msra.mxu0 0
    %614 = vmatprep.subr.bf16.mxu0 0
    %615 = vmatpush2.bf16.msra.mxu0 0
    %616 = vmatprep.subr.bf16.mxu0 0
    %617 = vmatpush2.bf16.msra.mxu0 0
    %618 = vmatprep.subr.bf16.mxu0 0
    %619 = vmatpush2.bf16.msra.mxu0 0
    %620 = vmatprep.subr.bf16.mxu0 0
    %621 = vmatpush2.bf16.msra.mxu0 0
    %622 = vmatprep.subr.bf16.mxu0 0
    %623 = vmatpush2.bf16.msra.mxu0 0
    %624 = vmatprep.subr.bf16.mxu0 0
    %625 = vmatpush2.bf16.msra.mxu0 0
    %626 = vmatprep.subr.bf16.mxu0 0
    %627 = vmatpush2.bf16.msra.mxu0 0
    %628 = vmatprep.mubr.bf16.mxu0 0
    %629 = vmatmul.mubr.bf16.gmra.mxu0 %v595
    %v630 = vpop.f32.mrf.mxu0
    %v631 = vadd.f32 0.0, %v630
    %v632 = vpop.f32.mrf.mxu0
    %v633 = vpop.f32.mrf.mxu0
    %v634 = vpop.f32.mrf.mxu0
    %635 = vdwg.mxu0
    %v636 = vadd.f32 %v594, %v631
    %637 = vst [vmem:[%s593] sm:$0xff] %v636
    %638 = vst [vmem:[#allocation2] sm:$0xff] %v636
    %v639 = vld [vmem:[#allocation3] sm:$0xff]
    %v640 = vld [vmem:[#allocation3 + $0x8] sm:$0xff]
    %v641 = vld [vmem:[#allocation3 + $0x10] sm:$0xff]
    %v642 = vld [vmem:[#allocation3 + $0x18] sm:$0xff]
    %v643 = vld [vmem:[#allocation3 + $0x20] sm:$0xff]
    %v644 = vld [vmem:[#allocation3 + $0x28] sm:$0xff]
    %v645 = vld [vmem:[#allocation3 + $0x30] sm:$0xff]
    %v646 = vld [vmem:[#allocation3 + $0x38] sm:$0xff]
    %v647 = vpack.c.bf16 %v640, %v639
    %v648 = vpack.c.bf16 %v642, %v641
    %v649 = vpack.c.bf16 %v644, %v643
    %v650 = vpack.c.bf16 %v646, %v645
    %v651 = vld [vmem:[#allocation10] sm:$0xf]
    %v652 = vld [vmem:[#allocation10 + $0x4] sm:$0xf]
    %v653 = vld [vmem:[#allocation10 + $0x8] sm:$0xf]
    %v654 = vld [vmem:[#allocation10 + $0xc] sm:$0xf]
    %v655 = vld [vmem:[#allocation10 + $0x10] sm:$0xf]
    %v656 = vld [vmem:[#allocation10 + $0x14] sm:$0xf]
    %v657 = vld [vmem:[#allocation10 + $0x18] sm:$0xf]
    %v658 = vld [vmem:[#allocation10 + $0x1c] sm:$0xf]
    %v659 = vld [vmem:[#allocation10 + $0x20] sm:$0xf]
    %v660 = vld [vmem:[#allocation10 + $0x24] sm:$0xf]
    %v661 = vld [vmem:[#allocation10 + $0x28] sm:$0xf]
    %v662 = vld [vmem:[#allocation10 + $0x2c] sm:$0xf]
    %v663 = vld [vmem:[#allocation10 + $0x30] sm:$0xf]
    %v664 = vld [vmem:[#allocation10 + $0x34] sm:$0xf]
    %v665 = vld [vmem:[#allocation10 + $0x38] sm:$0xf]
    %v666 = vld [vmem:[#allocation10 + $0x3c] sm:$0xf]
    %v667 = vld [vmem:[%s5] sm:$0x1]
    %v669 = vlaneseq
    %v670 = vshrl.u32 %v669, 7
    %v671 = vsub.s32 0, %v670
    %v672 = vrot.slane %v667, %v671
    %v690 = vunpack.c.l.b16 %v651
    %v691 = vunpack.c.l.b16 %v652
    %v692 = vunpack.c.l.b16 %v653
    %v693 = vunpack.c.l.b16 %v654
    %v694 = vunpack.c.l.b16 %v655
    %v695 = vunpack.c.l.b16 %v656
    %v696 = vunpack.c.l.b16 %v657
    %v697 = vunpack.c.l.b16 %v658
    %v698 = vunpack.c.l.b16 %v659
    %v699 = vunpack.c.l.b16 %v660
    %v700 = vunpack.c.l.b16 %v661
    %v701 = vunpack.c.l.b16 %v662
    %v702 = vunpack.c.l.b16 %v663
    %v703 = vunpack.c.l.b16 %v664
    %v704 = vunpack.c.l.b16 %v665
    %v705 = vunpack.c.l.b16 %v666
    %v706 = vpack.c.b16 %v691, %v690
    %v707 = vpack.c.b16 %v693, %v692
    %v708 = vpack.c.b16 %v695, %v694
    %v709 = vpack.c.b16 %v697, %v696
    %v710 = vpack.c.b16 %v699, %v698
    %v711 = vpack.c.b16 %v701, %v700
    %v712 = vpack.c.b16 %v703, %v702
    %v713 = vpack.c.b16 %v705, %v704
    %722 = vmatprep.subr.bf16.mxu0 0
    %723 = vmatpush1.bf16.msra.mxu0 %v713
    %724 = vmatprep.subr.bf16.mxu0 0
    %725 = vmatpush1.bf16.msra.mxu0 %v712
    %726 = vmatprep.subr.bf16.mxu0 0
    %727 = vmatpush1.bf16.msra.mxu0 %v711
    %728 = vmatprep.subr.bf16.mxu0 0
    %729 = vmatpush1.bf16.msra.mxu0 %v710
    %730 = vmatprep.subr.bf16.mxu0 0
    %731 = vmatpush1.bf16.msra.mxu0 %v709
    %732 = vmatprep.subr.bf16.mxu0 0
    %733 = vmatpush1.bf16.msra.mxu0 %v708
    %734 = vmatprep.subr.bf16.mxu0 0
    %735 = vmatpush1.bf16.msra.mxu0 %v707
    %736 = vmatprep.subr.bf16.mxu0 0
    %737 = vmatpush1.bf16.msra.mxu0 %v706
    %738 = vmatprep.subr.bf16.mxu0 0
    %739 = vmatpush2.bf16.msra.mxu0 0
    %740 = vmatprep.subr.bf16.mxu0 0
    %741 = vmatpush2.bf16.msra.mxu0 0
    %742 = vmatprep.subr.bf16.mxu0 0
    %743 = vmatpush2.bf16.msra.mxu0 0
    %744 = vmatprep.subr.bf16.mxu0 0
    %745 = vmatpush2.bf16.msra.mxu0 0
    %746 = vmatprep.subr.bf16.mxu0 0
    %747 = vmatpush2.bf16.msra.mxu0 0
    %748 = vmatprep.subr.bf16.mxu0 0
    %749 = vmatpush2.bf16.msra.mxu0 0
    %750 = vmatprep.subr.bf16.mxu0 0
    %751 = vmatpush2.bf16.msra.mxu0 0
    %752 = vmatprep.subr.bf16.mxu0 0
    %753 = vmatpush2.bf16.msra.mxu0 0
    %754 = vmatprep.mubr.bf16.mxu0 0
    %755 = vmatmul.mubr.bf16.gmra.mxu0 %v647
    %v756 = vpop.f32.mrf.mxu0
    %v757 = vadd.f32 %v672, %v756
    %v758 = vpop.f32.mrf.mxu0
    %v759 = vpop.f32.mrf.mxu0
    %v760 = vadd.f32 %v672, %v759
    %v761 = vpop.f32.mrf.mxu0
    %762 = vmatprep.mubr.bf16.mxu0 0
    %763 = vmatmul.mubr.bf16.gmra.mxu0 %v648
    %v764 = vpop.f32.mrf.mxu0
    %v765 = vadd.f32 %v672, %v764
    %v766 = vpop.f32.mrf.mxu0
    %v767 = vpop.f32.mrf.mxu0
    %v768 = vadd.f32 %v672, %v767
    %v769 = vpop.f32.mrf.mxu0
    %770 = vmatprep.mubr.bf16.mxu0 0
    %771 = vmatmul.mubr.bf16.gmra.mxu0 %v649
    %v772 = vpop.f32.mrf.mxu0
    %v773 = vadd.f32 %v672, %v772
    %v774 = vpop.f32.mrf.mxu0
    %v775 = vpop.f32.mrf.mxu0
    %v776 = vadd.f32 %v672, %v775
    %v777 = vpop.f32.mrf.mxu0
    %778 = vmatprep.mubr.bf16.mxu0 0
    %779 = vmatmul.mubr.bf16.gmra.mxu0 %v650
    %v780 = vpop.f32.mrf.mxu0
    %v781 = vadd.f32 %v672, %v780
    %v782 = vpop.f32.mrf.mxu0
    %v783 = vpop.f32.mrf.mxu0
    %v784 = vadd.f32 %v672, %v783
    %v785 = vpop.f32.mrf.mxu0
    %786 = vdwg.mxu0
    %v787 = vtanh.pop %v757
    %v788 = vtanh.pop %v760
    %v789 = vtanh.pop %v765
    %v790 = vtanh.pop %v768
    %v791 = vtanh.pop %v773
    %v792 = vtanh.pop %v776
    %v793 = vtanh.pop %v781
    %v794 = vtanh.pop %v784
    %795 = vst [vmem:[#allocation12] sm:$0xff] %v787
    %796 = vst [vmem:[#allocation12 + $0x8] sm:$0xff] %v788
    %797 = vst [vmem:[#allocation12 + $0x10] sm:$0xff] %v789
    %798 = vst [vmem:[#allocation12 + $0x18] sm:$0xff] %v790
    %799 = vst [vmem:[#allocation12 + $0x20] sm:$0xff] %v791
    %800 = vst [vmem:[#allocation12 + $0x28] sm:$0xff] %v792
    %801 = vst [vmem:[#allocation12 + $0x30] sm:$0xff] %v793
    %802 = vst [vmem:[#allocation12 + $0x38] sm:$0xff] %v794
    // Predicated region
    $region46: #{tpu_custom_call.1} parent=1 // pred_check
      _
    $region47: #{tpu_custom_call.1} parent=1 // pred_check_branch
      %804 = sbr.rel (0) target = $region49
    $region48: #{tpu_custom_call.1} parent=1 // pred_region
      %s806 = ssub.s32 1024, 1024
      %807 = vsyncadd [#allocation6], %s806
      %s808 = sshll.u32 [#allocation12], 4
      %s809 = int_to_ptr.vmem [resolvable:$true] %s808
      %814 = dma.vmem_to_hbm [thread:$0]  %s809, 1024, %s6, [#allocation6], 128, 128, 8
    $region49: #{tpu_custom_call.1} parent=1 // pred_fallthru
      _
    // Predicated region
    $region50: #{tpu_custom_call.1} parent=1 // pred_check
      _
    $region51: #{tpu_custom_call.1} parent=1 // pred_check_branch
      %816 = sbr.rel (0) target = $region53
    $region52: #{tpu_custom_call.1} parent=1 // pred_region
      %817 = dma.done [#allocation6], 1024
    $region53: #{tpu_custom_call.1} parent=1 // pred_fallthru
      _
    %818 = vsyncpa [#allocation5], 1
    %819 = vsyncpa [#allocation8], 1
    %820 = vsyncpa [#allocation11], 1
    %821 = vsyncpa [#allocation6], 1

// kernel: tpu_custom_call.1
$region0: #{tpu_custom_call.1}
  #allocation0 [shape = 'u32[]', space=smem, size = 0x4, offset = 0x4, fixed_abs, tag = 'smem constant byte address 0x4 - core index']
  #allocation1 [shape = 'u32[144,128]{1,0:T(1,128)}', space=vmem, size = 0x12000, scoped, tag = 'internal scratch']
  #allocation2 [shape = 'f32[8,128]{1,0:T(8,128)}', space=vmem, size = 0x1000, scoped, tag = 'scratch operand']
  #allocation3 [shape = 'f32[8,8,128]{2,1,0:T(8,128)}', space=vmem, size = 0x8000, scoped, tag = 'scratch operand']
  %s0 = inlined_call_operand.hbm [shape: bf16[8,8,16], index: 0, kind: input, shape index: {}]
  %s1 = inlined_call_operand.hbm [shape: bf16[16,128], index: 1, kind: input, shape index: {}]
  %s2 = inlined_call_operand.vmem [shape: f32[1,128], index: 2, kind: input, shape index: {}]
  %s3 = inlined_call_operand.hbm [shape: bf16[128,128], index: 3, kind: input, shape index: {}]
  %s4 = inlined_call_operand.hbm [shape: bf16[128,128], index: 4, kind: input, shape index: {}]
  %s5 = inlined_call_operand.vmem [shape: f32[1,128], index: 5, kind: input, shape index: {}]
  %s6 = inlined_call_operand.hbm [shape: f32[8,8,128], index: 6, kind: output, shape index: {}]
  %s7 = sld [smem:[#allocation0]]
  $region54: #{tpu_custom_call.1} parent=0
    _
  %s9 = ssub.s32 1, %s7
  %s10 = scalar_select 0, %s9, %s7
  $region1: #{tpu_custom_call.1} parent=0
    #allocation4 [shape = 'u8[16384]{0}', space=vmem, size = 0x4000, scoped, tag = 'input window, operand 0, single buffered']
    #allocation5 [shape = 's32[1]{0}', space=sflag, size = 0x4, scoped, tag = 'scoped memory for tpu_custom_call.1']
    #allocation6 [shape = 's32[1]{0}', space=sflag, size = 0x4, scoped, tag = 'scoped memory for tpu_custom_call.1']
    #allocation7 [shape = 'u8[4096]{0}', space=vmem, size = 0x1000, scoped, tag = 'input window, operand 1, single buffered']
    #allocation8 [shape = 's32[1]{0}', space=sflag, size = 0x4, scoped, tag = 'scoped memory for tpu_custom_call.1']
    #allocation9 [shape = 'u8[32768]{0}', space=vmem, size = 0x8000, scoped, tag = 'input window, operand 3, single buffered']
    #allocation10 [shape = 'u8[32768]{0}', space=vmem, size = 0x8000, scoped, tag = 'input window, operand 4, single buffered']
    #allocation11 [shape = 's32[1]{0}', space=sflag, size = 0x4, scoped, tag = 'scoped memory for tpu_custom_call.1']
    #allocation12 [shape = 'u8[32768]{0}', space=vmem, size = 0x8000, scoped, tag = 'output window, operand 0, single buffered']
    %11 = vsyncpa [#allocation5], 0
    %12 = vsyncpa [#allocation8], 0
    %13 = vsyncpa [#allocation11], 0
    %14 = vsyncpa [#allocation6], 0
    // Predicated region
    $region2: #{tpu_custom_call.1} parent=1 // pred_check
      _
    $region3: #{tpu_custom_call.1} parent=1 // pred_check_branch
      %16 = sbr.rel (0) target = $region5
    $region4: #{tpu_custom_call.1} parent=1 // pred_region
      %s18 = ssub.s32 512, 512
      %19 = vsyncadd [#allocation5], %s18
      %s20 = sshll.u32 [#allocation4], 4
      %s21 = int_to_ptr.vmem [resolvable:$true] %s20
      %26 = dma.hbm_to_vmem [thread:$0]  %s0, 512, %s21, [#allocation5], 64, 64, 4
    $region5: #{tpu_custom_call.1} parent=1 // pred_fallthru
      _
    // Predicated region
    $region6: #{tpu_custom_call.1} parent=1 // pred_check
      _
    $region7: #{tpu_custom_call.1} parent=1 // pred_check_branch
      %28 = sbr.rel (0) target = $region9
    $region8: #{tpu_custom_call.1} parent=1 // pred_region
      %s30 = ssub.s32 128, 128
      %31 = vsyncadd [#allocation8], %s30
      %s32 = sshll.u32 [#allocation7], 4
      %s33 = int_to_ptr.vmem [resolvable:$true] %s32
      %38 = dma.hbm_to_vmem [thread:$0]  %s1, 128, %s33, [#allocation8], 64, 64, 4
    $region9: #{tpu_custom_call.1} parent=1 // pred_fallthru
      _
    // Predicated region
    $region10: #{tpu_custom_call.1} parent=1 // pred_check
      _
    $region11: #{tpu_custom_call.1} parent=1 // pred_check_branch
      %40 = sbr.rel (0) target = $region13
    $region12: #{tpu_custom_call.1} parent=1 // pred_region
      _
    $region13: #{tpu_custom_call.1} parent=1 // pred_fallthru
      _
    // Predicated region
    $region14: #{tpu_custom_call.1} parent=1 // pred_check
      _
    $region15: #{tpu_custom_call.1} parent=1 // pred_check_branch
      %42 = sbr.rel (0) target = $region17
    $region16: #{tpu_custom_call.1} parent=1 // pred_region
      %s44 = ssub.s32 1024, 1024
      %45 = vsyncadd [#allocation8], %s44
      %s46 = sshll.u32 [#allocation9], 4
      %s47 = int_to_ptr.vmem [resolvable:$true] %s46
      %52 = dma.hbm_to_vmem [thread:$0]  %s3, 1024, %s47, [#allocation8], 64, 64, 4
    $region17: #{tpu_custom_call.1} parent=1 // pred_fallthru
      _
    // Predicated region
    $region18: #{tpu_custom_call.1} parent=1 // pred_check
      _
    $region19: #{tpu_custom_call.1} parent=1 // pred_check_branch
      %54 = sbr.rel (0) target = $region21
    $region20: #{tpu_custom_call.1} parent=1 // pred_region
      %s56 = ssub.s32 1024, 1024
      %57 = vsyncadd [#allocation11], %s56
      %s58 = sshll.u32 [#allocation10], 4
      %s59 = int_to_ptr.vmem [resolvable:$true] %s58
      %64 = dma.hbm_to_vmem [thread:$0]  %s4, 1024, %s59, [#allocation11], 64, 64, 4
    $region21: #{tpu_custom_call.1} parent=1 // pred_fallthru
      _
    // Predicated region
    $region22: #{tpu_custom_call.1} parent=1 // pred_check
      _
    $region23: #{tpu_custom_call.1} parent=1 // pred_check_branch
      %66 = sbr.rel (0) target = $region25
    $region24: #{tpu_custom_call.1} parent=1 // pred_region
      _
    $region25: #{tpu_custom_call.1} parent=1 // pred_fallthru
      _
    // Predicated region
    $region26: #{tpu_custom_call.1} parent=1 // pred_check
      _
    $region27: #{tpu_custom_call.1} parent=1 // pred_check_branch
      %68 = sbr.rel (0) target = $region29
    $region28: #{tpu_custom_call.1} parent=1 // pred_region
      %69 = dma.done [#allocation5], 512
    $region29: #{tpu_custom_call.1} parent=1 // pred_fallthru
      _
    // Predicated region
    $region30: #{tpu_custom_call.1} parent=1 // pred_check
      _
    $region31: #{tpu_custom_call.1} parent=1 // pred_check_branch
      %71 = sbr.rel (0) target = $region33
    $region32: #{tpu_custom_call.1} parent=1 // pred_region
      %72 = dma.done [#allocation8], 128
    $region33: #{tpu_custom_call.1} parent=1 // pred_fallthru
      _
    // Predicated region
    $region34: #{tpu_custom_call.1} parent=1 // pred_check
      _
    $region35: #{tpu_custom_call.1} parent=1 // pred_check_branch
      %74 = sbr.rel (0) target = $region37
    $region36: #{tpu_custom_call.1} parent=1 // pred_region
      %75 = dma.done [#allocation8], 1024
    $region37: #{tpu_custom_call.1} parent=1 // pred_fallthru
      _
    // Predicated region
    $region38: #{tpu_custom_call.1} parent=1 // pred_check
      _
    $region39: #{tpu_custom_call.1} parent=1 // pred_check_branch
      %77 = sbr.rel (0) target = $region41
    $region40: #{tpu_custom_call.1} parent=1 // pred_region
      %78 = dma.done [#allocation11], 1024
    $region41: #{tpu_custom_call.1} parent=1 // pred_fallthru
      _
    %p80 = scmp.eq.s32.totalorder 0, 0
    // Predicated region
    $region42: #{tpu_custom_call.1} parent=1 // pred_check
      %p81 = pneg %p80
    $region43: #{tpu_custom_call.1} parent=1 // pred_check_branch
      %83 = sbr.rel (%p81) target = $region45
    $region44: #{tpu_custom_call.1} parent=1 // pred_region
      %84 = vst [vmem:[#allocation2] sm:$0xff] 0.0
    $region45: #{tpu_custom_call.1} parent=1 // pred_fallthru
      _
    %v85 = vld [vmem:[#allocation4] sm:$0xf]
    %v86 = vld [vmem:[#allocation4 + $0x4] sm:$0xf]
    %v87 = vld [vmem:[#allocation4 + $0x8] sm:$0xf]
    %v88 = vld [vmem:[#allocation4 + $0xc] sm:$0xf]
    %v89 = vld [vmem:[#allocation4 + $0x10] sm:$0xf]
    %v90 = vld [vmem:[#allocation4 + $0x14] sm:$0xf]
    %v91 = vld [vmem:[#allocation4 + $0x18] sm:$0xf]
    %v92 = vld [vmem:[#allocation4 + $0x1c] sm:$0xf]
    %v93 = vld [vmem:[#allocation7] sm:$0xf]
    %v94 = vld [vmem:[#allocation7 + $0x4] sm:$0xf]
    %v95 = vld [vmem:[%s2] sm:$0x1]
    %v97 = vlaneseq
    %v98 = vshrl.u32 %v97, 7
    %v99 = vsub.s32 0, %v98
    %v100 = vrot.slane %v95, %v99
    %v110 = vunpack.c.l.b16 %v85
    %v111 = vunpack.c.l.b16 %v86
    %v112 = vunpack.c.l.b16 %v87
    %v113 = vunpack.c.l.b16 %v88
    %v114 = vunpack.c.l.b16 %v89
    %v115 = vunpack.c.l.b16 %v90
    %v116 = vunpack.c.l.b16 %v91
    %v117 = vunpack.c.l.b16 %v92
    %v118 = vpack.c.b16 %v111, %v110
    %v119 = vpack.c.b16 %v113, %v112
    %v120 = vpack.c.b16 %v115, %v114
    %v121 = vpack.c.b16 %v117, %v116
    %v124 = vunpack.c.l.b16 %v93
    %v125 = vunpack.c.l.b16 %v94
    %v126 = vpack.c.b16 %v125, %v124
    %vm128 = vcmask 130048
    %v130 = vsel %vm128, %v118, 0
    %v133 = vsel %vm128, %v119, 0
    %v136 = vsel %vm128, %v120, 0
    %v139 = vsel %vm128, %v121, 0
    %141 = vmatprep.subr.bf16.mxu0 0
    %142 = vmatpush1.bf16.msra.mxu0 0
    %143 = vmatprep.subr.bf16.mxu0 0
    %144 = vmatpush1.bf16.msra.mxu0 0
    %145 = vmatprep.subr.bf16.mxu0 0
    %146 = vmatpush1.bf16.msra.mxu0 0
    %147 = vmatprep.subr.bf16.mxu0 0
    %148 = vmatpush1.bf16.msra.mxu0 0
    %149 = vmatprep.subr.bf16.mxu0 0
    %150 = vmatpush1.bf16.msra.mxu0 0
    %151 = vmatprep.subr.bf16.mxu0 0
    %152 = vmatpush1.bf16.msra.mxu0 0
    %153 = vmatprep.subr.bf16.mxu0 0
    %154 = vmatpush1.bf16.msra.mxu0 0
    %155 = vmatprep.subr.bf16.mxu0 0
    %156 = vmatpush1.bf16.msra.mxu0 %v126
    %157 = vmatprep.subr.bf16.mxu0 0
    %158 = vmatpush2.bf16.msra.mxu0 0
    %159 = vmatprep.subr.bf16.mxu0 0
    %160 = vmatpush2.bf16.msra.mxu0 0
    %161 = vmatprep.subr.bf16.mxu0 0
    %162 = vmatpush2.bf16.msra.mxu0 0
    %163 = vmatprep.subr.bf16.mxu0 0
    %164 = vmatpush2.bf16.msra.mxu0 0
    %165 = vmatprep.subr.bf16.mxu0 0
    %166 = vmatpush2.bf16.msra.mxu0 0
    %167 = vmatprep.subr.bf16.mxu0 0
    %168 = vmatpush2.bf16.msra.mxu0 0
    %169 = vmatprep.subr.bf16.mxu0 0
    %170 = vmatpush2.bf16.msra.mxu0 0
    %171 = vmatprep.subr.bf16.mxu0 0
    %172 = vmatpush2.bf16.msra.mxu0 0
    %173 = vmatprep.mubr.bf16.mxu0 0
    %174 = vmatmul.mubr.bf16.gmra.mxu0 %v130
    %v175 = vpop.f32.mrf.mxu0
    %v176 = vadd.f32 %v100, %v175
    %v177 = vpop.f32.mrf.mxu0
    %v178 = vpop.f32.mrf.mxu0
    %v179 = vadd.f32 %v100, %v178
    %v180 = vpop.f32.mrf.mxu0
    %181 = vmatprep.mubr.bf16.mxu0 0
    %182 = vmatmul.mubr.bf16.gmra.mxu0 %v133
    %v183 = vpop.f32.mrf.mxu0
    %v184 = vadd.f32 %v100, %v183
    %v185 = vpop.f32.mrf.mxu0
    %v186 = vpop.f32.mrf.mxu0
    %v187 = vadd.f32 %v100, %v186
    %v188 = vpop.f32.mrf.mxu0
    %189 = vmatprep.mubr.bf16.mxu0 0
    %190 = vmatmul.mubr.bf16.gmra.mxu0 %v136
    %v191 = vpop.f32.mrf.mxu0
    %v192 = vadd.f32 %v100, %v191
    %v193 = vpop.f32.mrf.mxu0
    %v194 = vpop.f32.mrf.mxu0
    %v195 = vadd.f32 %v100, %v194
    %v196 = vpop.f32.mrf.mxu0
    %197 = vmatprep.mubr.bf16.mxu0 0
    %198 = vmatmul.mubr.bf16.gmra.mxu0 %v139
    %v199 = vpop.f32.mrf.mxu0
    %v200 = vadd.f32 %v100, %v199
    %v201 = vpop.f32.mrf.mxu0
    %v202 = vpop.f32.mrf.mxu0
    %v203 = vadd.f32 %v100, %v202
    %v204 = vpop.f32.mrf.mxu0
    %205 = vdwg.mxu0
    %206 = vst [vmem:[#allocation3] sm:$0xff] %v176
    %207 = vst [vmem:[#allocation3 + $0x8] sm:$0xff] %v179
    %208 = vst [vmem:[#allocation3 + $0x10] sm:$0xff] %v184
    %209 = vst [vmem:[#allocation3 + $0x18] sm:$0xff] %v187
    %210 = vst [vmem:[#allocation3 + $0x20] sm:$0xff] %v192
    %211 = vst [vmem:[#allocation3 + $0x28] sm:$0xff] %v195
    %212 = vst [vmem:[#allocation3 + $0x30] sm:$0xff] %v200
    %213 = vst [vmem:[#allocation3 + $0x38] sm:$0xff] %v203
    %v214 = vld [vmem:[#allocation9] sm:$0xf]
    %v215 = vld [vmem:[#allocation9 + $0x4] sm:$0xf]
    %v216 = vld [vmem:[#allocation9 + $0x8] sm:$0xf]
    %v217 = vld [vmem:[#allocation9 + $0xc] sm:$0xf]
    %v218 = vld [vmem:[#allocation9 + $0x10] sm:$0xf]
    %v219 = vld [vmem:[#allocation9 + $0x14] sm:$0xf]
    %v220 = vld [vmem:[#allocation9 + $0x18] sm:$0xf]
    %v221 = vld [vmem:[#allocation9 + $0x1c] sm:$0xf]
    %v222 = vld [vmem:[#allocation9 + $0x20] sm:$0xf]
    %v223 = vld [vmem:[#allocation9 + $0x24] sm:$0xf]
    %v224 = vld [vmem:[#allocation9 + $0x28] sm:$0xf]
    %v225 = vld [vmem:[#allocation9 + $0x2c] sm:$0xf]
    %v226 = vld [vmem:[#allocation9 + $0x30] sm:$0xf]
    %v227 = vld [vmem:[#allocation9 + $0x34] sm:$0xf]
    %v228 = vld [vmem:[#allocation9 + $0x38] sm:$0xf]
    %v229 = vld [vmem:[#allocation9 + $0x3c] sm:$0xf]
    %v230 = vld [vmem:[#allocation2] sm:$0xff]
    %v231 = vld [vmem:[#allocation3] sm:$0xff]
    %v232 = vpack.c.bf16 %v230, %v230
    %v249 = vunpack.c.l.b16 %v214
    %v250 = vunpack.c.l.b16 %v215
    %v251 = vunpack.c.l.b16 %v216
    %v252 = vunpack.c.l.b16 %v217
    %v253 = vunpack.c.l.b16 %v218
    %v254 = vunpack.c.l.b16 %v219
    %v255 = vunpack.c.l.b16 %v220
    %v256 = vunpack.c.l.b16 %v221
    %v257 = vunpack.c.l.b16 %v222
    %v258 = vunpack.c.l.b16 %v223
    %v259 = vunpack.c.l.b16 %v224
    %v260 = vunpack.c.l.b16 %v225
    %v261 = vunpack.c.l.b16 %v226
    %v262 = vunpack.c.l.b16 %v227
    %v263 = vunpack.c.l.b16 %v228
    %v264 = vunpack.c.l.b16 %v229
    %v265 = vpack.c.b16 %v250, %v249
    %v266 = vpack.c.b16 %v252, %v251
    %v267 = vpack.c.b16 %v254, %v253
    %v268 = vpack.c.b16 %v256, %v255
    %v269 = vpack.c.b16 %v258, %v257
    %v270 = vpack.c.b16 %v260, %v259
    %v271 = vpack.c.b16 %v262, %v261
    %v272 = vpack.c.b16 %v264, %v263
    %281 = vmatprep.subr.bf16.mxu0 0
    %282 = vmatpush1.bf16.msra.mxu0 %v272
    %283 = vmatprep.subr.bf16.mxu0 0
    %284 = vmatpush1.bf16.msra.mxu0 %v271
    %285 = vmatprep.subr.bf16.mxu0 0
    %286 = vmatpush1.bf16.msra.mxu0 %v270
    %287 = vmatprep.subr.bf16.mxu0 0
    %288 = vmatpush1.bf16.msra.mxu0 %v269
    %289 = vmatprep.subr.bf16.mxu0 0
    %290 = vmatpush1.bf16.msra.mxu0 %v268
    %291 = vmatprep.subr.bf16.mxu0 0
    %292 = vmatpush1.bf16.msra.mxu0 %v267
    %293 = vmatprep.subr.bf16.mxu0 0
    %294 = vmatpush1.bf16.msra.mxu0 %v266
    %295 = vmatprep.subr.bf16.mxu0 0
    %296 = vmatpush1.bf16.msra.mxu0 %v265
    %297 = vmatprep.subr.bf16.mxu0 0
    %298 = vmatpush2.bf16.msra.mxu0 0
    %299 = vmatprep.subr.bf16.mxu0 0
    %300 = vmatpush2.bf16.msra.mxu0 0
    %301 = vmatprep.subr.bf16.mxu0 0
    %302 = vmatpush2.bf16.msra.mxu0 0
    %303 = vmatprep.subr.bf16.mxu0 0
    %304 = vmatpush2.bf16.msra.mxu0 0
    %305 = vmatprep.subr.bf16.mxu0 0
    %306 = vmatpush2.bf16.msra.mxu0 0
    %307 = vmatprep.subr.bf16.mxu0 0
    %308 = vmatpush2.bf16.msra.mxu0 0
    %309 = vmatprep.subr.bf16.mxu0 0
    %310 = vmatpush2.bf16.msra.mxu0 0
    %311 = vmatprep.subr.bf16.mxu0 0
    %312 = vmatpush2.bf16.msra.mxu0 0
    %313 = vmatprep.mubr.bf16.mxu0 0
    %314 = vmatmul.mubr.bf16.gmra.mxu0 %v232
    %v315 = vpop.f32.mrf.mxu0
    %v316 = vadd.f32 0.0, %v315
    %v317 = vpop.f32.mrf.mxu0
    %v318 = vpop.f32.mrf.mxu0
    %v319 = vpop.f32.mrf.mxu0
    %320 = vdwg.mxu0
    %v321 = vadd.f32 %v231, %v316
    %322 = vst [vmem:[#allocation3] sm:$0xff] %v321
    %s323 = scalar_lea.vmem [#allocation3], 8
    %v324 = vld [vmem:[%s323] sm:$0xff]
    %v325 = vpack.c.bf16 %v321, %v321
    %326 = vmatprep.subr.bf16.mxu0 0
    %327 = vmatpush1.bf16.msra.mxu0 %v272
    %328 = vmatprep.subr.bf16.mxu0 0
    %329 = vmatpush1.bf16.msra.mxu0 %v271
    %330 = vmatprep.subr.bf16.mxu0 0
    %331 = vmatpush1.bf16.msra.mxu0 %v270
    %332 = vmatprep.subr.bf16.mxu0 0
    %333 = vmatpush1.bf16.msra.mxu0 %v269
    %334 = vmatprep.subr.bf16.mxu0 0
    %335 = vmatpush1.bf16.msra.mxu0 %v268
    %336 = vmatprep.subr.bf16.mxu0 0
    %337 = vmatpush1.bf16.msra.mxu0 %v267
    %338 = vmatprep.subr.bf16.mxu0 0
    %339 = vmatpush1.bf16.msra.mxu0 %v266
    %340 = vmatprep.subr.bf16.mxu0 0
    %341 = vmatpush1.bf16.msra.mxu0 %v265
    %342 = vmatprep.subr.bf16.mxu0 0
    %343 = vmatpush2.bf16.msra.mxu0 0
    %344 = vmatprep.subr.bf16.mxu0 0
    %345 = vmatpush2.bf16.msra.mxu0 0
    %346 = vmatprep.subr.bf16.mxu0 0
    %347 = vmatpush2.bf16.msra.mxu0 0
    %348 = vmatprep.subr.bf16.mxu0 0
    %349 = vmatpush2.bf16.msra.mxu0 0
    %350 = vmatprep.subr.bf16.mxu0 0
    %351 = vmatpush2.bf16.msra.mxu0 0
    %352 = vmatprep.subr.bf16.mxu0 0
    %353 = vmatpush2.bf16.msra.mxu0 0
    %354 = vmatprep.subr.bf16.mxu0 0
    %355 = vmatpush2.bf16.msra.mxu0 0
    %356 = vmatprep.subr.bf16.mxu0 0
    %357 = vmatpush2.bf16.msra.mxu0 0
    %358 = vmatprep.mubr.bf16.mxu0 0
    %359 = vmatmul.mubr.bf16.gmra.mxu0 %v325
    %v360 = vpop.f32.mrf.mxu0
    %v361 = vadd.f32 0.0, %v360
    %v362 = vpop.f32.mrf.mxu0
    %v363 = vpop.f32.mrf.mxu0
    %v364 = vpop.f32.mrf.mxu0
    %365 = vdwg.mxu0
    %v366 = vadd.f32 %v324, %v361
    %367 = vst [vmem:[%s323] sm:$0xff] %v366
    %s368 = scalar_lea.vmem [#allocation3], 16
    %v369 = vld [vmem:[%s368] sm:$0xff]
    %v370 = vpack.c.bf16 %v366, %v366
    %371 = vmatprep.subr.bf16.mxu0 0
    %372 = vmatpush1.bf16.msra.mxu0 %v272
    %373 = vmatprep.subr.bf16.mxu0 0
    %374 = vmatpush1.bf16.msra.mxu0 %v271
    %375 = vmatprep.subr.bf16.mxu0 0
    %376 = vmatpush1.bf16.msra.mxu0 %v270
    %377 = vmatprep.subr.bf16.mxu0 0
    %378 = vmatpush1.bf16.msra.mxu0 %v269
    %379 = vmatprep.subr.bf16.mxu0 0
    %380 = vmatpush1.bf16.msra.mxu0 %v268
    %381 = vmatprep.subr.bf16.mxu0 0
    %382 = vmatpush1.bf16.msra.mxu0 %v267
    %383 = vmatprep.subr.bf16.mxu0 0
    %384 = vmatpush1.bf16.msra.mxu0 %v266
    %385 = vmatprep.subr.bf16.mxu0 0
    %386 = vmatpush1.bf16.msra.mxu0 %v265
    %387 = vmatprep.subr.bf16.mxu0 0
    %388 = vmatpush2.bf16.msra.mxu0 0
    %389 = vmatprep.subr.bf16.mxu0 0
    %390 = vmatpush2.bf16.msra.mxu0 0
    %391 = vmatprep.subr.bf16.mxu0 0
    %392 = vmatpush2.bf16.msra.mxu0 0
    %393 = vmatprep.subr.bf16.mxu0 0
    %394 = vmatpush2.bf16.msra.mxu0 0
    %395 = vmatprep.subr.bf16.mxu0 0
    %396 = vmatpush2.bf16.msra.mxu0 0
    %397 = vmatprep.subr.bf16.mxu0 0
    %398 = vmatpush2.bf16.msra.mxu0 0
    %399 = vmatprep.subr.bf16.mxu0 0
    %400 = vmatpush2.bf16.msra.mxu0 0
    %401 = vmatprep.subr.bf16.mxu0 0
    %402 = vmatpush2.bf16.msra.mxu0 0
    %403 = vmatprep.mubr.bf16.mxu0 0
    %404 = vmatmul.mubr.bf16.gmra.mxu0 %v370
    %v405 = vpop.f32.mrf.mxu0
    %v406 = vadd.f32 0.0, %v405
    %v407 = vpop.f32.mrf.mxu0
    %v408 = vpop.f32.mrf.mxu0
    %v409 = vpop.f32.mrf.mxu0
    %410 = vdwg.mxu0
    %v411 = vadd.f32 %v369, %v406
    %412 = vst [vmem:[%s368] sm:$0xff] %v411
    %s413 = scalar_lea.vmem [#allocation3], 24
    %v414 = vld [vmem:[%s413] sm:$0xff]
    %v415 = vpack.c.bf16 %v411, %v411
    %416 = vmatprep.subr.bf16.mxu0 0
    %417 = vmatpush1.bf16.msra.mxu0 %v272
    %418 = vmatprep.subr.bf16.mxu0 0
    %419 = vmatpush1.bf16.msra.mxu0 %v271
    %420 = vmatprep.subr.bf16.mxu0 0
    %421 = vmatpush1.bf16.msra.mxu0 %v270
    %422 = vmatprep.subr.bf16.mxu0 0
    %423 = vmatpush1.bf16.msra.mxu0 %v269
    %424 = vmatprep.subr.bf16.mxu0 0
    %425 = vmatpush1.bf16.msra.mxu0 %v268
    %426 = vmatprep.subr.bf16.mxu0 0
    %427 = vmatpush1.bf16.msra.mxu0 %v267
    %428 = vmatprep.subr.bf16.mxu0 0
    %429 = vmatpush1.bf16.msra.mxu0 %v266
    %430 = vmatprep.subr.bf16.mxu0 0
    %431 = vmatpush1.bf16.msra.mxu0 %v265
    %432 = vmatprep.subr.bf16.mxu0 0
    %433 = vmatpush2.bf16.msra.mxu0 0
    %434 = vmatprep.subr.bf16.mxu0 0
    %435 = vmatpush2.bf16.msra.mxu0 0
    %436 = vmatprep.subr.bf16.mxu0 0
    %437 = vmatpush2.bf16.msra.mxu0 0
    %438 = vmatprep.subr.bf16.mxu0 0
    %439 = vmatpush2.bf16.msra.mxu0 0
    %440 = vmatprep.subr.bf16.mxu0 0
    %441 = vmatpush2.bf16.msra.mxu0 0
    %442 = vmatprep.subr.bf16.mxu0 0
    %443 = vmatpush2.bf16.msra.mxu0 0
    %444 = vmatprep.subr.bf16.mxu0 0
    %445 = vmatpush2.bf16.msra.mxu0 0
    %446 = vmatprep.subr.bf16.mxu0 0
    %447 = vmatpush2.bf16.msra.mxu0 0
    %448 = vmatprep.mubr.bf16.mxu0 0
    %449 = vmatmul.mubr.bf16.gmra.mxu0 %v415
    %v450 = vpop.f32.mrf.mxu0
    %v451 = vadd.f32 0.0, %v450
    %v452 = vpop.f32.mrf.mxu0
    %v453 = vpop.f32.mrf.mxu0
    %v454 = vpop.f32.mrf.mxu0
    %455 = vdwg.mxu0
    %v456 = vadd.f32 %v414, %v451
    %457 = vst [vmem:[%s413] sm:$0xff] %v456
    %s458 = scalar_lea.vmem [#allocation3], 32
    %v459 = vld [vmem:[%s458] sm:$0xff]
    %v460 = vpack.c.bf16 %v456, %v456
    %461 = vmatprep.subr.bf16.mxu0 0
    %462 = vmatpush1.bf16.msra.mxu0 %v272
    %463 = vmatprep.subr.bf16.mxu0 0
    %464 = vmatpush1.bf16.msra.mxu0 %v271
    %465 = vmatprep.subr.bf16.mxu0 0
    %466 = vmatpush1.bf16.msra.mxu0 %v270
    %467 = vmatprep.subr.bf16.mxu0 0
    %468 = vmatpush1.bf16.msra.mxu0 %v269
    %469 = vmatprep.subr.bf16.mxu0 0
    %470 = vmatpush1.bf16.msra.mxu0 %v268
    %471 = vmatprep.subr.bf16.mxu0 0
    %472 = vmatpush1.bf16.msra.mxu0 %v267
    %473 = vmatprep.subr.bf16.mxu0 0
    %474 = vmatpush1.bf16.msra.mxu0 %v266
    %475 = vmatprep.subr.bf16.mxu0 0
    %476 = vmatpush1.bf16.msra.mxu0 %v265
    %477 = vmatprep.subr.bf16.mxu0 0
    %478 = vmatpush2.bf16.msra.mxu0 0
    %479 = vmatprep.subr.bf16.mxu0 0
    %480 = vmatpush2.bf16.msra.mxu0 0
    %481 = vmatprep.subr.bf16.mxu0 0
    %482 = vmatpush2.bf16.msra.mxu0 0
    %483 = vmatprep.subr.bf16.mxu0 0
    %484 = vmatpush2.bf16.msra.mxu0 0
    %485 = vmatprep.subr.bf16.mxu0 0
    %486 = vmatpush2.bf16.msra.mxu0 0
    %487 = vmatprep.subr.bf16.mxu0 0
    %488 = vmatpush2.bf16.msra.mxu0 0
    %489 = vmatprep.subr.bf16.mxu0 0
    %490 = vmatpush2.bf16.msra.mxu0 0
    %491 = vmatprep.subr.bf16.mxu0 0
    %492 = vmatpush2.bf16.msra.mxu0 0
    %493 = vmatprep.mubr.bf16.mxu0 0
    %494 = vmatmul.mubr.bf16.gmra.mxu0 %v460
    %v495 = vpop.f32.mrf.mxu0
    %v496 = vadd.f32 0.0, %v495
    %v497 = vpop.f32.mrf.mxu0
    %v498 = vpop.f32.mrf.mxu0
    %v499 = vpop.f32.mrf.mxu0
    %500 = vdwg.mxu0
    %v501 = vadd.f32 %v459, %v496
    %502 = vst [vmem:[%s458] sm:$0xff] %v501
    %s503 = scalar_lea.vmem [#allocation3], 40
    %v504 = vld [vmem:[%s503] sm:$0xff]
    %v505 = vpack.c.bf16 %v501, %v501
    %506 = vmatprep.subr.bf16.mxu0 0
    %507 = vmatpush1.bf16.msra.mxu0 %v272
    %508 = vmatprep.subr.bf16.mxu0 0
    %509 = vmatpush1.bf16.msra.mxu0 %v271
    %510 = vmatprep.subr.bf16.mxu0 0
    %511 = vmatpush1.bf16.msra.mxu0 %v270
    %512 = vmatprep.subr.bf16.mxu0 0
    %513 = vmatpush1.bf16.msra.mxu0 %v269
    %514 = vmatprep.subr.bf16.mxu0 0
    %515 = vmatpush1.bf16.msra.mxu0 %v268
    %516 = vmatprep.subr.bf16.mxu0 0
    %517 = vmatpush1.bf16.msra.mxu0 %v267
    %518 = vmatprep.subr.bf16.mxu0 0
    %519 = vmatpush1.bf16.msra.mxu0 %v266
    %520 = vmatprep.subr.bf16.mxu0 0
    %521 = vmatpush1.bf16.msra.mxu0 %v265
    %522 = vmatprep.subr.bf16.mxu0 0
    %523 = vmatpush2.bf16.msra.mxu0 0
    %524 = vmatprep.subr.bf16.mxu0 0
    %525 = vmatpush2.bf16.msra.mxu0 0
    %526 = vmatprep.subr.bf16.mxu0 0
    %527 = vmatpush2.bf16.msra.mxu0 0
    %528 = vmatprep.subr.bf16.mxu0 0
    %529 = vmatpush2.bf16.msra.mxu0 0
    %530 = vmatprep.subr.bf16.mxu0 0
    %531 = vmatpush2.bf16.msra.mxu0 0
    %532 = vmatprep.subr.bf16.mxu0 0
    %533 = vmatpush2.bf16.msra.mxu0 0
    %534 = vmatprep.subr.bf16.mxu0 0
    %535 = vmatpush2.bf16.msra.mxu0 0
    %536 = vmatprep.subr.bf16.mxu0 0
    %537 = vmatpush2.bf16.msra.mxu0 0
    %538 = vmatprep.mubr.bf16.mxu0 0
    %539 = vmatmul.mubr.bf16.gmra.mxu0 %v505
    %v540 = vpop.f32.mrf.mxu0
    %v541 = vadd.f32 0.0, %v540
    %v542 = vpop.f32.mrf.mxu0
    %v543 = vpop.f32.mrf.mxu0
    %v544 = vpop.f32.mrf.mxu0
    %545 = vdwg.mxu0
    %v546 = vadd.f32 %v504, %v541
    %547 = vst [vmem:[%s503] sm:$0xff] %v546
    %s548 = scalar_lea.vmem [#allocation3], 48
    %v549 = vld [vmem:[%s548] sm:$0xff]
    %v550 = vpack.c.bf16 %v546, %v546
    %551 = vmatprep.subr.bf16.mxu0 0
    %552 = vmatpush1.bf16.msra.mxu0 %v272
    %553 = vmatprep.subr.bf16.mxu0 0
    %554 = vmatpush1.bf16.msra.mxu0 %v271
    %555 = vmatprep.subr.bf16.mxu0 0
    %556 = vmatpush1.bf16.msra.mxu0 %v270
    %557 = vmatprep.subr.bf16.mxu0 0
    %558 = vmatpush1.bf16.msra.mxu0 %v269
    %559 = vmatprep.subr.bf16.mxu0 0
    %560 = vmatpush1.bf16.msra.mxu0 %v268
    %561 = vmatprep.subr.bf16.mxu0 0
    %562 = vmatpush1.bf16.msra.mxu0 %v267
    %563 = vmatprep.subr.bf16.mxu0 0
    %564 = vmatpush1.bf16.msra.mxu0 %v266
    %565 = vmatprep.subr.bf16.mxu0 0
    %566 = vmatpush1.bf16.msra.mxu0 %v265
    %567 = vmatprep.subr.bf16.mxu0 0
    %568 = vmatpush2.bf16.msra.mxu0 0
    %569 = vmatprep.subr.bf16.mxu0 0
    %570 = vmatpush2.bf16.msra.mxu0 0
    %571 = vmatprep.subr.bf16.mxu0 0
    %572 = vmatpush2.bf16.msra.mxu0 0
    %573 = vmatprep.subr.bf16.mxu0 0
    %574 = vmatpush2.bf16.msra.mxu0 0
    %575 = vmatprep.subr.bf16.mxu0 0
    %576 = vmatpush2.bf16.msra.mxu0 0
    %577 = vmatprep.subr.bf16.mxu0 0
    %578 = vmatpush2.bf16.msra.mxu0 0
    %579 = vmatprep.subr.bf16.mxu0 0
    %580 = vmatpush2.bf16.msra.mxu0 0
    %581 = vmatprep.subr.bf16.mxu0 0
    %582 = vmatpush2.bf16.msra.mxu0 0
    %583 = vmatprep.mubr.bf16.mxu0 0
    %584 = vmatmul.mubr.bf16.gmra.mxu0 %v550
    %v585 = vpop.f32.mrf.mxu0
    %v586 = vadd.f32 0.0, %v585
    %v587 = vpop.f32.mrf.mxu0
    %v588 = vpop.f32.mrf.mxu0
    %v589 = vpop.f32.mrf.mxu0
    %590 = vdwg.mxu0
    %v591 = vadd.f32 %v549, %v586
    %592 = vst [vmem:[%s548] sm:$0xff] %v591
    %s593 = scalar_lea.vmem [#allocation3], 56
    %v594 = vld [vmem:[%s593] sm:$0xff]
    %v595 = vpack.c.bf16 %v591, %v591
    %596 = vmatprep.subr.bf16.mxu0 0
    %597 = vmatpush1.bf16.msra.mxu0 %v272
    %598 = vmatprep.subr.bf16.mxu0 0
    %599 = vmatpush1.bf16.msra.mxu0 %v271
    %600 = vmatprep.subr.bf16.mxu0 0
    %601 = vmatpush1.bf16.msra.mxu0 %v270
    %602 = vmatprep.subr.bf16.mxu0 0
    %603 = vmatpush1.bf16.msra.mxu0 %v269
    %604 = vmatprep.subr.bf16.mxu0 0
    %605 = vmatpush1.bf16.msra.mxu0 %v268
    %606 = vmatprep.subr.bf16.mxu0 0
    %607 = vmatpush1.bf16.msra.mxu0 %v267
    %608 = vmatprep.subr.bf16.mxu0 0
    %609 = vmatpush1.bf16.msra.mxu0 %v266
    %610 = vmatprep.subr.bf16.mxu0 0
    %611 = vmatpush1.bf16.msra.mxu0 %v265
    %612 = vmatprep.subr.bf16.mxu0 0
    %613 = vmatpush2.bf16.msra.mxu0 0
    %614 = vmatprep.subr.bf16.mxu0 0
    %615 = vmatpush2.bf16.msra.mxu0 0
    %616 = vmatprep.subr.bf16.mxu0 0
    %617 = vmatpush2.bf16.msra.mxu0 0
    %618 = vmatprep.subr.bf16.mxu0 0
    %619 = vmatpush2.bf16.msra.mxu0 0
    %620 = vmatprep.subr.bf16.mxu0 0
    %621 = vmatpush2.bf16.msra.mxu0 0
    %622 = vmatprep.subr.bf16.mxu0 0
    %623 = vmatpush2.bf16.msra.mxu0 0
    %624 = vmatprep.subr.bf16.mxu0 0
    %625 = vmatpush2.bf16.msra.mxu0 0
    %626 = vmatprep.subr.bf16.mxu0 0
    %627 = vmatpush2.bf16.msra.mxu0 0
    %628 = vmatprep.mubr.bf16.mxu0 0
    %629 = vmatmul.mubr.bf16.gmra.mxu0 %v595
    %v630 = vpop.f32.mrf.mxu0
    %v631 = vadd.f32 0.0, %v630
    %v632 = vpop.f32.mrf.mxu0
    %v633 = vpop.f32.mrf.mxu0
    %v634 = vpop.f32.mrf.mxu0
    %635 = vdwg.mxu0
    %v636 = vadd.f32 %v594, %v631
    %637 = vst [vmem:[%s593] sm:$0xff] %v636
    %638 = vst [vmem:[#allocation2] sm:$0xff] %v636
    %v639 = vld [vmem:[#allocation3] sm:$0xff]
    %v640 = vld [vmem:[#allocation3 + $0x8] sm:$0xff]
    %v641 = vld [vmem:[#allocation3 + $0x10] sm:$0xff]
    %v642 = vld [vmem:[#allocation3 + $0x18] sm:$0xff]
    %v643 = vld [vmem:[#allocation3 + $0x20] sm:$0xff]
    %v644 = vld [vmem:[#allocation3 + $0x28] sm:$0xff]
    %v645 = vld [vmem:[#allocation3 + $0x30] sm:$0xff]
    %v646 = vld [vmem:[#allocation3 + $0x38] sm:$0xff]
    %v647 = vpack.c.bf16 %v640, %v639
    %v648 = vpack.c.bf16 %v642, %v641
    %v649 = vpack.c.bf16 %v644, %v643
    %v650 = vpack.c.bf16 %v646, %v645
    %v651 = vld [vmem:[#allocation10] sm:$0xf]
    %v652 = vld [vmem:[#allocation10 + $0x4] sm:$0xf]
    %v653 = vld [vmem:[#allocation10 + $0x8] sm:$0xf]
    %v654 = vld [vmem:[#allocation10 + $0xc] sm:$0xf]
    %v655 = vld [vmem:[#allocation10 + $0x10] sm:$0xf]
    %v656 = vld [vmem:[#allocation10 + $0x14] sm:$0xf]
    %v657 = vld [vmem:[#allocation10 + $0x18] sm:$0xf]
    %v658 = vld [vmem:[#allocation10 + $0x1c] sm:$0xf]
    %v659 = vld [vmem:[#allocation10 + $0x20] sm:$0xf]
    %v660 = vld [vmem:[#allocation10 + $0x24] sm:$0xf]
    %v661 = vld [vmem:[#allocation10 + $0x28] sm:$0xf]
    %v662 = vld [vmem:[#allocation10 + $0x2c] sm:$0xf]
    %v663 = vld [vmem:[#allocation10 + $0x30] sm:$0xf]
    %v664 = vld [vmem:[#allocation10 + $0x34] sm:$0xf]
    %v665 = vld [vmem:[#allocation10 + $0x38] sm:$0xf]
    %v666 = vld [vmem:[#allocation10 + $0x3c] sm:$0xf]
    %v667 = vld [vmem:[%s5] sm:$0x1]
    %v669 = vlaneseq
    %v670 = vshrl.u32 %v669, 7
    %v671 = vsub.s32 0, %v670
    %v672 = vrot.slane %v667, %v671
    %v690 = vunpack.c.l.b16 %v651
    %v691 = vunpack.c.l.b16 %v652
    %v692 = vunpack.c.l.b16 %v653
    %v693 = vunpack.c.l.b16 %v654
    %v694 = vunpack.c.l.b16 %v655
    %v695 = vunpack.c.l.b16 %v656
    %v696 = vunpack.c.l.b16 %v657
    %v697 = vunpack.c.l.b16 %v658
    %v698 = vunpack.c.l.b16 %v659
    %v699 = vunpack.c.l.b16 %v660
    %v700 = vunpack.c.l.b16 %v661
    %v701 = vunpack.c.l.b16 %v662
    %v702 = vunpack.c.l.b16 %v663
    %v703 = vunpack.c.l.b16 %v664
    %v704 = vunpack.c.l.b16 %v665
    %v705 = vunpack.c.l.b16 %v666
    %v706 = vpack.c.b16 %v691, %v690
    %v707 = vpack.c.b16 %v693, %v692
    %v708 = vpack.c.b16 %v695, %v694
    %v709 = vpack.c.b16 %v697, %v696
    %v710 = vpack.c.b16 %v699, %v698
    %v711 = vpack.c.b16 %v701, %v700
    %v712 = vpack.c.b16 %v703, %v702
    %v713 = vpack.c.b16 %v705, %v704
    %722 = vmatprep.subr.bf16.mxu0 0
    %723 = vmatpush1.bf16.msra.mxu0 %v713
    %724 = vmatprep.subr.bf16.mxu0 0
    %725 = vmatpush1.bf16.msra.mxu0 %v712
    %726 = vmatprep.subr.bf16.mxu0 0
    %727 = vmatpush1.bf16.msra.mxu0 %v711
    %728 = vmatprep.subr.bf16.mxu0 0
    %729 = vmatpush1.bf16.msra.mxu0 %v710
    %730 = vmatprep.subr.bf16.mxu0 0
    %731 = vmatpush1.bf16.msra.mxu0 %v709
    %732 = vmatprep.subr.bf16.mxu0 0
    %733 = vmatpush1.bf16.msra.mxu0 %v708
    %734 = vmatprep.subr.bf16.mxu0 0
    %735 = vmatpush1.bf16.msra.mxu0 %v707
    %736 = vmatprep.subr.bf16.mxu0 0
    %737 = vmatpush1.bf16.msra.mxu0 %v706
    %738 = vmatprep.subr.bf16.mxu0 0
    %739 = vmatpush2.bf16.msra.mxu0 0
    %740 = vmatprep.subr.bf16.mxu0 0
    %741 = vmatpush2.bf16.msra.mxu0 0
    %742 = vmatprep.subr.bf16.mxu0 0
    %743 = vmatpush2.bf16.msra.mxu0 0
    %744 = vmatprep.subr.bf16.mxu0 0
    %745 = vmatpush2.bf16.msra.mxu0 0
    %746 = vmatprep.subr.bf16.mxu0 0
    %747 = vmatpush2.bf16.msra.mxu0 0
    %748 = vmatprep.subr.bf16.mxu0 0
    %749 = vmatpush2.bf16.msra.mxu0 0
    %750 = vmatprep.subr.bf16.mxu0 0
    %751 = vmatpush2.bf16.msra.mxu0 0
    %752 = vmatprep.subr.bf16.mxu0 0
    %753 = vmatpush2.bf16.msra.mxu0 0
    %754 = vmatprep.mubr.bf16.mxu0 0
    %755 = vmatmul.mubr.bf16.gmra.mxu0 %v647
    %v756 = vpop.f32.mrf.mxu0
    %v757 = vadd.f32 %v672, %v756
    %v758 = vpop.f32.mrf.mxu0
    %v759 = vpop.f32.mrf.mxu0
    %v760 = vadd.f32 %v672, %v759
    %v761 = vpop.f32.mrf.mxu0
    %762 = vmatprep.mubr.bf16.mxu0 0
    %763 = vmatmul.mubr.bf16.gmra.mxu0 %v648
    %v764 = vpop.f32.mrf.mxu0
    %v765 = vadd.f32 %v672, %v764
    %v766 = vpop.f32.mrf.mxu0
    %v767 = vpop.f32.mrf.mxu0
    %v768 = vadd.f32 %v672, %v767
    %v769 = vpop.f32.mrf.mxu0
    %770 = vmatprep.mubr.bf16.mxu0 0
    %771 = vmatmul.mubr.bf16.gmra.mxu0 %v649
    %v772 = vpop.f32.mrf.mxu0
    %v773 = vadd.f32 %v672, %v772
    %v774 = vpop.f32.mrf.mxu0
    %v775 = vpop.f32.mrf.mxu0
    %v776 = vadd.f32 %v672, %v775
    %v777 = vpop.f32.mrf.mxu0
    %778 = vmatprep.mubr.bf16.mxu0 0
    %779 = vmatmul.mubr.bf16.gmra.mxu0 %v650
    %v780 = vpop.f32.mrf.mxu0
    %v781 = vadd.f32 %v672, %v780
    %v782 = vpop.f32.mrf.mxu0
    %v783 = vpop.f32.mrf.mxu0
    %v784 = vadd.f32 %v672, %v783
    %v785 = vpop.f32.mrf.mxu0
    %786 = vdwg.mxu0
    %v787 = vtanh.pop %v757
    %v788 = vtanh.pop %v760
    %v789 = vtanh.pop %v765
    %v790 = vtanh.pop %v768
    %v791 = vtanh.pop %v773
    %v792 = vtanh.pop %v776
    %v793 = vtanh.pop %v781
    %v794 = vtanh.pop %v784
    %795 = vst [vmem:[#allocation12] sm:$0xff] %v787
    %796 = vst [vmem:[#allocation12 + $0x8] sm:$0xff] %v788
    %797 = vst [vmem:[#allocation12 + $0x10] sm:$0xff] %v789
    %798 = vst [vmem:[#allocation12 + $0x18] sm:$0xff] %v790
    %799 = vst [vmem:[#allocation12 + $0x20] sm:$0xff] %v791
    %800 = vst [vmem:[#allocation12 + $0x28] sm:$0xff] %v792
    %801 = vst [vmem:[#allocation12 + $0x30] sm:$0xff] %v793
    %802 = vst [vmem:[#allocation12 + $0x38] sm:$0xff] %v794
    // Predicated region
    $region46: #{tpu_custom_call.1} parent=1 // pred_check
      _
    $region47: #{tpu_custom_call.1} parent=1 // pred_check_branch
      %804 = sbr.rel (0) target = $region49
    $region48: #{tpu_custom_call.1} parent=1 // pred_region
      %s806 = ssub.s32 1024, 1024
      %807 = vsyncadd [#allocation6], %s806
      %s808 = sshll.u32 [#allocation12], 4
      %s809 = int_to_ptr.vmem [resolvable:$true] %s808
      %814 = dma.vmem_to_hbm [thread:$0]  %s809, 1024, %s6, [#allocation6], 128, 128, 8
    $region49: #{tpu_custom_call.1} parent=1 // pred_fallthru
      _
    // Predicated region
    $region50: #{tpu_custom_call.1} parent=1 // pred_check
      _
    $region51: #{tpu_custom_call.1} parent=1 // pred_check_branch
      %816 = sbr.rel (0) target = $region53
    $region52: #{tpu_custom_call.1} parent=1 // pred_region
      %817 = dma.done [#allocation6], 1024
    $region53: #{tpu_custom_call.1} parent=1 // pred_fallthru
      _
    %818 = vsyncpa [#allocation5], 1
    %819 = vsyncpa [#allocation8], 1
    %820 = vsyncpa [#allocation11], 1
    %821 = vsyncpa [#allocation6], 1

</llo_original>
